<compile_context>
chip_gen: v7x
topology: tpu7x:2x2x1
jax: 0.10.0
libtpu: 0.0.40
codegen_flags: <defaults>
</compile_context>

<pallas_src>
import functools

import jax
import jax.numpy as jnp
from jax.experimental import pallas as pl
from jax.experimental.pallas import tpu as pltpu


def _round_up(x, m):
    return (x + m - 1) // m * m


def _vae_kernel(x_ref, eps_ref,
                w1_ref, b1_ref,
                wms_ref, bms_ref,
                w2_ref, b2_ref,
                w3_ref, b3_ref,
                xrec_ref, musig_ref,
                *, z_dim):
    # MXU operand dtype follows the weight dtype (f32 or bf16); accumulation and
    # all elementwise math stay in f32.
    cdt = w1_ref.dtype
    x = x_ref[...]

    # encode: h = relu(x @ W1 + b1)
    h = jnp.dot(x.astype(cdt), w1_ref[...],
                preferred_element_type=jnp.float32) + b1_ref[...]
    h = jnp.maximum(h, 0.0)

    # fused (and lane-padded) mu|sigma head: one matmul -> [TB, ms_pad] slab
    musig = jnp.dot(h.astype(cdt), wms_ref[...],
                    preferred_element_type=jnp.float32) + bms_ref[...]
    mu = musig[:, :z_dim]
    sigma = musig[:, z_dim:2 * z_dim]

    # reparameterize: z = mu + sigma * eps
    z = mu + sigma * eps_ref[...]

    # decode: h2 = relu(z @ W2 + b2); x_rec = sigmoid(h2 @ W3 + b3)
    h2 = jnp.dot(z.astype(cdt), w2_ref[...],
                 preferred_element_type=jnp.float32) + b2_ref[...]
    h2 = jnp.maximum(h2, 0.0)
    logits = jnp.dot(h2.astype(cdt), w3_ref[...],
                     preferred_element_type=jnp.float32) + b3_ref[...]

    xrec_ref[...] = jax.nn.sigmoid(logits).astype(xrec_ref.dtype)
    musig_ref[...] = musig.astype(musig_ref.dtype)


def _pick_block_b(B, target=128):
    """Largest batch tile <= target that evenly divides B (prefer mult. of 8)."""
    if B % target == 0:
        return target
    for tb in range(min(target, B), 0, -1):
        if B % tb == 0 and (tb % 8 == 0 or tb == B):
            return tb
    return B


@functools.partial(jax.jit, static_argnames=("block_b",))
def vae_forward(x, eps, params, *, block_b=128):
    B, input_dim = x.shape
    z_dim = eps.shape[1]
    h_dim = params["w1"].shape[1]
    ms_pad = params["wms"].shape[1]          # 2*z_dim rounded up to 128 lanes

    tb = _pick_block_b(B, block_b)
    grid = (B // tb,)

    # Batch-blocked specs for activations; weights/biases are resident (same
    # block index every grid step -> loaded once, kept in VMEM).
    batched = lambda d: pl.BlockSpec((tb, d), lambda i: (i, 0))
    resident = lambda shape: pl.BlockSpec(shape, lambda i: (0, 0))

    in_specs = [
        batched(input_dim),                      # x
        batched(z_dim),                          # eps
        resident(params["w1"].shape), resident(params["b1"].shape),
        resident(params["wms"].shape), resident(params["bms"].shape),
        resident(params["w2"].shape), resident(params["b2"].shape),
        resident(params["w3"].shape), resident(params["b3"].shape),
    ]
    out_specs = (batched(input_dim), batched(ms_pad))
    out_shapes = (
        jax.ShapeDtypeStruct((B, input_dim), jnp.float32),   # x_rec
        jax.ShapeDtypeStruct((B, ms_pad), jnp.float32),      # mu | sigma | pad
    )

    flops = 2 * B * (input_dim * h_dim + h_dim * ms_pad
                     + z_dim * h_dim + h_dim * input_dim)
    transcendentals = B * input_dim  # sigmoid on the reconstruction
    bytes_accessed = (
        x.size * x.dtype.itemsize + eps.size * eps.dtype.itemsize
        + sum(int(p.size) * p.dtype.itemsize for p in params.values())
        + B * input_dim * 4 + B * ms_pad * 4)

    x_rec, musig = pl.pallas_call(
        functools.partial(_vae_kernel, z_dim=z_dim),
        out_shape=out_shapes,
        grid_spec=pltpu.PrefetchScalarGridSpec(
            num_scalar_prefetch=0,
            grid=grid,
            in_specs=in_specs,
            out_specs=out_specs,
        ),
        compiler_params=pltpu.CompilerParams(
            dimension_semantics=("parallel",),   # shard batch across TCs on v7x
        ),
        cost_estimate=pl.CostEstimate(
            flops=flops,
            transcendentals=transcendentals,
            bytes_accessed=bytes_accessed,
        ),
    )(x, eps,
      params["w1"], params["b1"],
      params["wms"], params["bms"],
      params["w2"], params["b2"],
      params["w3"], params["b3"])

    mu = musig[:, :z_dim]
    sigma = musig[:, z_dim:2 * z_dim]
    return x_rec, mu, sigma


def init_params(key, input_dim, h_dim, z_dim, weight_dtype=jnp.float32):
    """Deterministic init. Linear weights stored [in, out]; mu/sigma heads fused
    into one [h_dim, round_up(2*z_dim, 128)] matmul (zero-padded extra columns).

    Weights cast to `weight_dtype` (f32 or bf16); biases stay f32 (elementwise).
    """
    ks = jax.random.split(key, 10)

    def linear(kw, kb, fan_in, fan_out):
        # mimic PyTorch's default uniform(-1/sqrt(fan_in), 1/sqrt(fan_in))
        bound = 1.0 / jnp.sqrt(fan_in)
        w = jax.random.uniform(kw, (fan_in, fan_out), jnp.float32, -bound, bound)
        b = jax.random.uniform(kb, (1, fan_out), jnp.float32, -bound, bound)
        return w, b

    w1, b1 = linear(ks[0], ks[1], input_dim, h_dim)     # img_2hid
    wmu, bmu = linear(ks[2], ks[3], h_dim, z_dim)       # hid_2mu
    wsig, bsig = linear(ks[4], ks[5], h_dim, z_dim)     # hid_2sigma
    w2, b2 = linear(ks[6], ks[7], z_dim, h_dim)         # z_2hid
    w3, b3 = linear(ks[8], ks[9], h_dim, input_dim)     # hid_2img

    # Fuse the two z_dim heads and zero-pad the column axis to 128 lanes so the
    # kernel's mu|sigma output slab is lane-dense (unmasked stores).
    ms_pad = _round_up(2 * z_dim, 128)
    wms = jnp.zeros((h_dim, ms_pad), jnp.float32)
    wms = wms.at[:, :z_dim].set(wmu).at[:, z_dim:2 * z_dim].set(wsig)
    bms = jnp.zeros((1, ms_pad), jnp.float32)
    bms = bms.at[:, :z_dim].set(bmu).at[:, z_dim:2 * z_dim].set(bsig)

    cast = lambda w: w.astype(weight_dtype)
    return dict(w1=cast(w1), b1=b1,
                wms=cast(wms), bms=bms,
                w2=cast(w2), b2=b2,
                w3=cast(w3), b3=b3)


def vae_forward_ref(x, eps, p):
    """Pure-JAX reference with identical dot-operand casting as the kernel."""
    def dot(a, w):
        return jnp.dot(a.astype(w.dtype), w, preferred_element_type=jnp.float32)

    z_dim = eps.shape[1]
    h = jnp.maximum(dot(x, p["w1"]) + p["b1"], 0.0)
    musig = dot(h, p["wms"]) + p["bms"]
    mu, sigma = musig[:, :z_dim], musig[:, z_dim:2 * z_dim]
    z = mu + sigma * eps
    h2 = jnp.maximum(dot(z, p["w2"]) + p["b2"], 0.0)
    x_rec = jax.nn.sigmoid(dot(h2, p["w3"]) + p["b3"])
    return x_rec, mu, sigma


if __name__ == "__main__":
    # Small MLP-VAE shapes; B=256 with TB=128 exercises the batch grid.
    B, INPUT_DIM, H_DIM, Z_DIM = 256, 64, 32, 16

    key = jax.random.PRNGKey(0)
    k_x, k_eps, k_params = jax.random.split(key, 3)

    x = jax.random.uniform(k_x, (B, INPUT_DIM), jnp.float32)    # "image" in [0,1)
    eps = jax.random.normal(k_eps, (B, Z_DIM), jnp.float32)     # torch.randn_like(sigma)

    # --- f32 weights: exact match against the f32 reference ---
    params = init_params(k_params, INPUT_DIM, H_DIM, Z_DIM, weight_dtype=jnp.float32)
    x_rec, mu, sigma = vae_forward(x, eps, params)
    jax.block_until_ready((x_rec, mu, sigma))

    x_rec_r, mu_r, sigma_r = vae_forward_ref(x, eps, params)
    assert x_rec.shape == (B, INPUT_DIM) and mu.shape == (B, Z_DIM) and sigma.shape == (B, Z_DIM)
    assert jnp.allclose(x_rec, x_rec_r, atol=1e-5, rtol=1e-5)
    assert jnp.allclose(mu, mu_r, atol=1e-5, rtol=1e-5)
    assert jnp.allclose(sigma, sigma_r, atol=1e-5, rtol=1e-5)

    # --- bf16 weights (MXU-native on v6e/v7x): compare vs bf16-cast reference ---
    params_bf16 = init_params(k_params, INPUT_DIM, H_DIM, Z_DIM, weight_dtype=jnp.bfloat16)
    x_rec_b, mu_b, sigma_b = vae_forward(x, eps, params_bf16)
    jax.block_until_ready((x_rec_b, mu_b, sigma_b))

    x_rec_br, mu_br, sigma_br = vae_forward_ref(x, eps, params_bf16)
    assert jnp.allclose(x_rec_b, x_rec_br, atol=1e-3, rtol=1e-3)
    assert jnp.allclose(mu_b, mu_br, atol=1e-3, rtol=1e-3)
    assert jnp.allclose(sigma_b, sigma_br, atol=1e-3, rtol=1e-3)

    print("KERNEL_OK")
</pallas_src>

<mosaic_0001>
module attributes {stable_mosaic.version = 11 : i64} {
  func.func @_vae_kernel(%arg0: i32, %arg1: memref<128x64xf32, #tpu.memory_space<vmem>>, %arg2: memref<128x16xf32, #tpu.memory_space<vmem>>, %arg3: memref<64x32xf32, #tpu.memory_space<vmem>>, %arg4: memref<1x32xf32, #tpu.memory_space<vmem>>, %arg5: memref<32x128xf32, #tpu.memory_space<vmem>>, %arg6: memref<1x128xf32, #tpu.memory_space<vmem>>, %arg7: memref<16x32xf32, #tpu.memory_space<vmem>>, %arg8: memref<1x32xf32, #tpu.memory_space<vmem>>, %arg9: memref<32x64xf32, #tpu.memory_space<vmem>>, %arg10: memref<1x64xf32, #tpu.memory_space<vmem>>, %arg11: memref<128x64xf32, #tpu.memory_space<vmem>>, %arg12: memref<128x128xf32, #tpu.memory_space<vmem>>) attributes {dimension_semantics = [#tpu.dimension_semantics<parallel>], iteration_bounds = array<i64: 2>, scalar_prefetch = 0 : i64, scratch_operands = 0 : i64, tpu.core_type = #tpu.core_type<tc>, window_params = [{transform_indices = @transform_0, window_bounds = array<i64: 128, 64>}, {transform_indices = @transform_1, window_bounds = array<i64: 128, 16>}, {pipeline_mode = #tpu.pipeline_mode<synchronous>, transform_indices = @transform_2, window_bounds = array<i64: 64, 32>}, {pipeline_mode = #tpu.pipeline_mode<synchronous>, transform_indices = @transform_3, window_bounds = array<i64: 1, 32>}, {pipeline_mode = #tpu.pipeline_mode<synchronous>, transform_indices = @transform_4, window_bounds = array<i64: 32, 128>}, {pipeline_mode = #tpu.pipeline_mode<synchronous>, transform_indices = @transform_5, window_bounds = array<i64: 1, 128>}, {pipeline_mode = #tpu.pipeline_mode<synchronous>, transform_indices = @transform_6, window_bounds = array<i64: 16, 32>}, {pipeline_mode = #tpu.pipeline_mode<synchronous>, transform_indices = @transform_7, window_bounds = array<i64: 1, 32>}, {pipeline_mode = #tpu.pipeline_mode<synchronous>, transform_indices = @transform_8, window_bounds = array<i64: 32, 64>}, {pipeline_mode = #tpu.pipeline_mode<synchronous>, transform_indices = @transform_9, window_bounds = array<i64: 1, 64>}, {transform_indices = @transform_10, window_bounds = array<i64: 128, 64>}, {transform_indices = @transform_11, window_bounds = array<i64: 128, 128>}]} {
    %c0 = arith.constant 0 : index
    %c0_0 = arith.constant 0 : index
    %0 = vector.load %arg1[%c0, %c0_0] : memref<128x64xf32, #tpu.memory_space<vmem>>, vector<128x64xf32>
    %c0_1 = arith.constant 0 : index
    %c0_2 = arith.constant 0 : index
    %1 = vector.load %arg3[%c0_1, %c0_2] : memref<64x32xf32, #tpu.memory_space<vmem>>, vector<64x32xf32>
    %cst = arith.constant dense<0.000000e+00> : vector<128x32xf32>
    %2 = tpu.matmul %0, %1, %cst {dimension_numbers = #tpu.dot_dimension_numbers<[1], [0], [0], [1], [0, 0, 1, 1], [], []>} : vector<128x64xf32>, vector<64x32xf32>, vector<128x32xf32> -> vector<128x32xf32>
    %c0_3 = arith.constant 0 : index
    %c0_4 = arith.constant 0 : index
    %3 = vector.load %arg4[%c0_3, %c0_4] : memref<1x32xf32, #tpu.memory_space<vmem>>, vector<1x32xf32>
    %4 = vector.broadcast %3 : vector<1x32xf32> to vector<128x32xf32>
    %5 = arith.addf %2, %4 : vector<128x32xf32>
    %cst_5 = arith.constant 0.000000e+00 : f32
    %6 = vector.broadcast %cst_5 : f32 to vector<128x32xf32>
    %7 = arith.maximumf %5, %6 : vector<128x32xf32>
    %c0_6 = arith.constant 0 : index
    %c0_7 = arith.constant 0 : index
    %8 = vector.load %arg5[%c0_6, %c0_7] : memref<32x128xf32, #tpu.memory_space<vmem>>, vector<32x128xf32>
    %cst_8 = arith.constant dense<0.000000e+00> : vector<128x128xf32>
    %9 = tpu.matmul %7, %8, %cst_8 {dimension_numbers = #tpu.dot_dimension_numbers<[1], [0], [0], [1], [0, 0, 1, 1], [], []>} : vector<128x32xf32>, vector<32x128xf32>, vector<128x128xf32> -> vector<128x128xf32>
    %c0_9 = arith.constant 0 : index
    %c0_10 = arith.constant 0 : index
    %10 = vector.load %arg6[%c0_9, %c0_10] : memref<1x128xf32, #tpu.memory_space<vmem>>, vector<1x128xf32>
    %11 = vector.broadcast %10 : vector<1x128xf32> to vector<128x128xf32>
    %12 = arith.addf %9, %11 : vector<128x128xf32>
    %13 = vector.extract_strided_slice %12 {offsets = [0, 0], sizes = [128, 16], strides = [1, 1]} : vector<128x128xf32> to vector<128x16xf32>
    %14 = vector.extract_strided_slice %12 {offsets = [0, 16], sizes = [128, 16], strides = [1, 1]} : vector<128x128xf32> to vector<128x16xf32>
    %c0_11 = arith.constant 0 : index
    %c0_12 = arith.constant 0 : index
    %15 = vector.load %arg2[%c0_11, %c0_12] : memref<128x16xf32, #tpu.memory_space<vmem>>, vector<128x16xf32>
    %16 = arith.mulf %14, %15 : vector<128x16xf32>
    %17 = arith.addf %13, %16 : vector<128x16xf32>
    %c0_13 = arith.constant 0 : index
    %c0_14 = arith.constant 0 : index
    %18 = vector.load %arg7[%c0_13, %c0_14] : memref<16x32xf32, #tpu.memory_space<vmem>>, vector<16x32xf32>
    %cst_15 = arith.constant dense<0.000000e+00> : vector<128x32xf32>
    %19 = tpu.matmul %17, %18, %cst_15 {dimension_numbers = #tpu.dot_dimension_numbers<[1], [0], [0], [1], [0, 0, 1, 1], [], []>} : vector<128x16xf32>, vector<16x32xf32>, vector<128x32xf32> -> vector<128x32xf32>
    %c0_16 = arith.constant 0 : index
    %c0_17 = arith.constant 0 : index
    %20 = vector.load %arg8[%c0_16, %c0_17] : memref<1x32xf32, #tpu.memory_space<vmem>>, vector<1x32xf32>
    %21 = vector.broadcast %20 : vector<1x32xf32> to vector<128x32xf32>
    %22 = arith.addf %19, %21 : vector<128x32xf32>
    %cst_18 = arith.constant 0.000000e+00 : f32
    %23 = vector.broadcast %cst_18 : f32 to vector<128x32xf32>
    %24 = arith.maximumf %22, %23 : vector<128x32xf32>
    %c0_19 = arith.constant 0 : index
    %c0_20 = arith.constant 0 : index
    %25 = vector.load %arg9[%c0_19, %c0_20] : memref<32x64xf32, #tpu.memory_space<vmem>>, vector<32x64xf32>
    %cst_21 = arith.constant dense<0.000000e+00> : vector<128x64xf32>
    %26 = tpu.matmul %24, %25, %cst_21 {dimension_numbers = #tpu.dot_dimension_numbers<[1], [0], [0], [1], [0, 0, 1, 1], [], []>} : vector<128x32xf32>, vector<32x64xf32>, vector<128x64xf32> -> vector<128x64xf32>
    %c0_22 = arith.constant 0 : index
    %c0_23 = arith.constant 0 : index
    %27 = vector.load %arg10[%c0_22, %c0_23] : memref<1x64xf32, #tpu.memory_space<vmem>>, vector<1x64xf32>
    %28 = vector.broadcast %27 : vector<1x64xf32> to vector<128x64xf32>
    %29 = arith.addf %26, %28 : vector<128x64xf32>
    %30 = arith.negf %29 : vector<128x64xf32>
    %31 = math.exp %30 : vector<128x64xf32>
    %cst_24 = arith.constant 1.000000e+00 : f32
    %32 = vector.broadcast %cst_24 : f32 to vector<128x64xf32>
    %33 = arith.addf %32, %31 : vector<128x64xf32>
    %34 = arith.divf %32, %33 : vector<128x64xf32>
    %c0_25 = arith.constant 0 : index
    %c0_26 = arith.constant 0 : index
    %35 = vector.load %arg11[%c0_25, %c0_26] : memref<128x64xf32, #tpu.memory_space<vmem>>, vector<128x64xf32>
    tpu.vector_store %arg11[%c0_25, %c0_26], %34 {strides = array<i32>} : memref<128x64xf32, #tpu.memory_space<vmem>>, vector<128x64xf32>,
    %c0_27 = arith.constant 0 : index
    %c0_28 = arith.constant 0 : index
    %36 = vector.load %arg12[%c0_27, %c0_28] : memref<128x128xf32, #tpu.memory_space<vmem>>, vector<128x128xf32>
    tpu.vector_store %arg12[%c0_27, %c0_28], %12 {strides = array<i32>} : memref<128x128xf32, #tpu.memory_space<vmem>>, vector<128x128xf32>,
    return
  }
  func.func @transform_0(%arg0: i32) -> (i32, i32) {
    %c0_i32 = arith.constant 0 : i32
    %c0_i32_0 = arith.constant 0 : i32
    return %arg0, %c0_i32 : i32, i32
  }
  func.func @transform_1(%arg0: i32) -> (i32, i32) {
    %c0_i32 = arith.constant 0 : i32
    %c0_i32_0 = arith.constant 0 : i32
    return %arg0, %c0_i32 : i32, i32
  }
  func.func @transform_2(%arg0: i32) -> (i32, i32) {
    %c0_i32 = arith.constant 0 : i32
    %c0_i32_0 = arith.constant 0 : i32
    %c0_i32_1 = arith.constant 0 : i32
    return %c0_i32, %c0_i32_0 : i32, i32
  }
  func.func @transform_3(%arg0: i32) -> (i32, i32) {
    %c0_i32 = arith.constant 0 : i32
    %c0_i32_0 = arith.constant 0 : i32
    %c0_i32_1 = arith.constant 0 : i32
    return %c0_i32, %c0_i32_0 : i32, i32
  }
  func.func @transform_4(%arg0: i32) -> (i32, i32) {
    %c0_i32 = arith.constant 0 : i32
    %c0_i32_0 = arith.constant 0 : i32
    %c0_i32_1 = arith.constant 0 : i32
    return %c0_i32, %c0_i32_0 : i32, i32
  }
  func.func @transform_5(%arg0: i32) -> (i32, i32) {
    %c0_i32 = arith.constant 0 : i32
    %c0_i32_0 = arith.constant 0 : i32
    %c0_i32_1 = arith.constant 0 : i32
    return %c0_i32, %c0_i32_0 : i32, i32
  }
  func.func @transform_6(%arg0: i32) -> (i32, i32) {
    %c0_i32 = arith.constant 0 : i32
    %c0_i32_0 = arith.constant 0 : i32
    %c0_i32_1 = arith.constant 0 : i32
    return %c0_i32, %c0_i32_0 : i32, i32
  }
  func.func @transform_7(%arg0: i32) -> (i32, i32) {
    %c0_i32 = arith.constant 0 : i32
    %c0_i32_0 = arith.constant 0 : i32
    %c0_i32_1 = arith.constant 0 : i32
    return %c0_i32, %c0_i32_0 : i32, i32
  }
  func.func @transform_8(%arg0: i32) -> (i32, i32) {
    %c0_i32 = arith.constant 0 : i32
    %c0_i32_0 = arith.constant 0 : i32
    %c0_i32_1 = arith.constant 0 : i32
    return %c0_i32, %c0_i32_0 : i32, i32
  }
  func.func @transform_9(%arg0: i32) -> (i32, i32) {
    %c0_i32 = arith.constant 0 : i32
    %c0_i32_0 = arith.constant 0 : i32
    %c0_i32_1 = arith.constant 0 : i32
    return %c0_i32, %c0_i32_0 : i32, i32
  }
  func.func @transform_10(%arg0: i32) -> (i32, i32) {
    %c0_i32 = arith.constant 0 : i32
    %c0_i32_0 = arith.constant 0 : i32
    return %arg0, %c0_i32 : i32, i32
  }
  func.func @transform_11(%arg0: i32) -> (i32, i32) {
    %c0_i32 = arith.constant 0 : i32
    %c0_i32_0 = arith.constant 0 : i32
    return %arg0, %c0_i32 : i32, i32
  }
}

</mosaic_0001>

<llo_original>
// kernel: vae_forward.1
$region0: #{vae_forward.1}
  #allocation0 [shape = 'u32[]', space=smem, size = 0x4, offset = 0x4, fixed_abs, tag = 'smem constant byte address 0x4 - core index']
  #allocation1 [shape = 'u32[144,128]{1,0:T(1,128)}', space=vmem, size = 0x12000, scoped, tag = 'internal scratch']
  %s0 = inlined_call_operand.vmem [shape: f32[256,64], index: 0, kind: input, shape index: {}]
  %s1 = inlined_call_operand.vmem [shape: f32[256,16], index: 1, kind: input, shape index: {}]
  %s2 = inlined_call_operand.vmem [shape: f32[64,32], index: 2, kind: input, shape index: {}]
  %s3 = inlined_call_operand.vmem [shape: f32[1,32], index: 3, kind: input, shape index: {}]
  %s4 = inlined_call_operand.vmem [shape: f32[32,128], index: 4, kind: input, shape index: {}]
  %s5 = inlined_call_operand.vmem [shape: f32[1,128], index: 5, kind: input, shape index: {}]
  %s6 = inlined_call_operand.vmem [shape: f32[16,32], index: 6, kind: input, shape index: {}]
  %s7 = inlined_call_operand.vmem [shape: f32[1,32], index: 7, kind: input, shape index: {}]
  %s8 = inlined_call_operand.vmem [shape: f32[32,64], index: 8, kind: input, shape index: {}]
  %s9 = inlined_call_operand.vmem [shape: f32[1,64], index: 9, kind: input, shape index: {}]
  %s10 = inlined_call_operand.vmem [shape: f32[256,64], index: 10, kind: output, shape index: {0}]
  %s11 = inlined_call_operand.vmem [shape: f32[256,128], index: 11, kind: output, shape index: {1}]
  %12 = xla_tuple %s10, %s11
  %s13 = sld [smem:[#allocation0]]
  $region81: #{vae_forward.1} parent=0
    _
  %s15 = ssub.s32 1, %s13
  %s16 = scalar_select 0, %s15, %s13
  loop: start=0, step=1, limit=4
  $region2: #{vae_forward.1} parent=0 // loop_pre_header
    _
  $region3: #{vae_forward.1} parent=0 // loop_header
    %s18 = sphi 0, %s22
    %p19 = scmp.ge.s32.totalorder %s18, 4
    %s28 = sphi 0, %s30
    %s31 = sphi 0, %s28
    %s32 = sphi 0, %s31
    %s48 = sphi 0, %s32
    %s54 = sphi 0, %s56
    %s57 = sphi 0, %s54
    %s58 = sphi 0, %s57
    %s74 = sphi 0, %s58
    %s78 = sphi 0, %s78
    %s80 = sphi 0, %s78
    %s81 = sphi 0, %s80
    %s95 = sphi 0, %s81
    %s99 = sphi 0, %s99
    %s101 = sphi 0, %s99
    %s102 = sphi 0, %s101
    %s116 = sphi 0, %s102
    %s120 = sphi 0, %s120
    %s122 = sphi 0, %s120
    %s123 = sphi 0, %s122
    %s137 = sphi 0, %s123
    %s141 = sphi 0, %s141
    %s143 = sphi 0, %s141
    %s144 = sphi 0, %s143
    %s158 = sphi 0, %s144
    %s162 = sphi 0, %s162
    %s164 = sphi 0, %s162
    %s165 = sphi 0, %s164
    %s179 = sphi 0, %s165
    %s183 = sphi 0, %s183
    %s185 = sphi 0, %s183
    %s186 = sphi 0, %s185
    %s200 = sphi 0, %s186
    %s204 = sphi 0, %s204
    %s206 = sphi 0, %s204
    %s207 = sphi 0, %s206
    %s221 = sphi 0, %s207
    %s225 = sphi 0, %s225
    %s227 = sphi 0, %s225
    %s228 = sphi 0, %s227
    %s242 = sphi 0, %s228
    %s248 = sphi 0, %s250
    %s251 = sphi 0, %s248
    %s252 = sphi 0, %s251
    %s268 = sphi 0, %s252
    %s274 = sphi 0, %s276
    %s277 = sphi 0, %s274
    %s278 = sphi 0, %s277
    %s294 = sphi 0, %s278
  $region4: #{vae_forward.1} parent=0 // loop_header_branch
    %21 = sbr.rel (%p19) target = $region8
  $region5: #{vae_forward.1} parent=0 // loop_body
    %s23 = ssub.s32 %s18, 1
    %s24 = ssub.s32 %s18, 2
    %s25 = sadd.s32 %s18, 1
    %s26 = ssub.s32 %s18, %s25
    %p27 = scmp.eq.s32.totalorder %s26, 0
    %s29 = sadd.s32 %s28, 1
    %s30 = scalar_select %p27, %s28, %s29
    %p33 = pneg %p27
    %p34 = scmp.eq.s32.totalorder %s18, 1
    %p35 = por %p33, %p34
    %p36 = scmp.ne.s32.totalorder %s28, %s31
    %p37 = scmp.eq.s32.totalorder %s18, 0
    %p38 = por %p36, %p37
    %p39 = scmp.ne.s32.totalorder %s28, %s31
    %p40 = scmp.eq.s32.totalorder %s23, 1
    %p41 = por %p39, %p40
    %p42 = scmp.ne.s32.totalorder %s31, %s32
    %p43 = scmp.eq.s32.totalorder %s23, 0
    %p44 = por %p42, %p43
    %p45 = scmp.ne.s32.totalorder %s31, %s32
    %p46 = scmp.eq.s32.totalorder %s24, 1
    %p47 = por %p45, %p46
    %p49 = scmp.ne.s32.totalorder %s32, %s48
    %p50 = scmp.eq.s32.totalorder %s24, 0
    %p51 = por %p49, %p50
    %s52 = ssub.s32 %s18, %s25
    %p53 = scmp.eq.s32.totalorder %s52, 0
    %s55 = sadd.s32 %s54, 1
    %s56 = scalar_select %p53, %s54, %s55
    %p59 = pneg %p53
    %p60 = scmp.eq.s32.totalorder %s18, 1
    %p61 = por %p59, %p60
    %p62 = scmp.ne.s32.totalorder %s54, %s57
    %p63 = scmp.eq.s32.totalorder %s18, 0
    %p64 = por %p62, %p63
    %p65 = scmp.ne.s32.totalorder %s54, %s57
    %p66 = scmp.eq.s32.totalorder %s23, 1
    %p67 = por %p65, %p66
    %p68 = scmp.ne.s32.totalorder %s57, %s58
    %p69 = scmp.eq.s32.totalorder %s23, 0
    %p70 = por %p68, %p69
    %p71 = scmp.ne.s32.totalorder %s57, %s58
    %p72 = scmp.eq.s32.totalorder %s24, 1
    %p73 = por %p71, %p72
    %p75 = scmp.ne.s32.totalorder %s58, %s74
    %p76 = scmp.eq.s32.totalorder %s24, 0
    %p77 = por %p75, %p76
    %s79 = sadd.s32 %s78, 1
    %p82 = scmp.eq.s32.totalorder %s18, 1
    %p83 = scmp.ne.s32.totalorder %s78, %s80
    %p84 = scmp.eq.s32.totalorder %s18, 0
    %p85 = por %p83, %p84
    %p86 = scmp.ne.s32.totalorder %s78, %s80
    %p87 = scmp.eq.s32.totalorder %s23, 1
    %p88 = por %p86, %p87
    %p89 = scmp.ne.s32.totalorder %s80, %s81
    %p90 = scmp.eq.s32.totalorder %s23, 0
    %p91 = por %p89, %p90
    %p92 = scmp.ne.s32.totalorder %s80, %s81
    %p93 = scmp.eq.s32.totalorder %s24, 1
    %p94 = por %p92, %p93
    %p96 = scmp.ne.s32.totalorder %s81, %s95
    %p97 = scmp.eq.s32.totalorder %s24, 0
    %p98 = por %p96, %p97
    %s100 = sadd.s32 %s99, 1
    %p103 = scmp.eq.s32.totalorder %s18, 1
    %p104 = scmp.ne.s32.totalorder %s99, %s101
    %p105 = scmp.eq.s32.totalorder %s18, 0
    %p106 = por %p104, %p105
    %p107 = scmp.ne.s32.totalorder %s99, %s101
    %p108 = scmp.eq.s32.totalorder %s23, 1
    %p109 = por %p107, %p108
    %p110 = scmp.ne.s32.totalorder %s101, %s102
    %p111 = scmp.eq.s32.totalorder %s23, 0
    %p112 = por %p110, %p111
    %p113 = scmp.ne.s32.totalorder %s101, %s102
    %p114 = scmp.eq.s32.totalorder %s24, 1
    %p115 = por %p113, %p114
    %p117 = scmp.ne.s32.totalorder %s102, %s116
    %p118 = scmp.eq.s32.totalorder %s24, 0
    %p119 = por %p117, %p118
    %s121 = sadd.s32 %s120, 1
    %p124 = scmp.eq.s32.totalorder %s18, 1
    %p125 = scmp.ne.s32.totalorder %s120, %s122
    %p126 = scmp.eq.s32.totalorder %s18, 0
    %p127 = por %p125, %p126
    %p128 = scmp.ne.s32.totalorder %s120, %s122
    %p129 = scmp.eq.s32.totalorder %s23, 1
    %p130 = por %p128, %p129
    %p131 = scmp.ne.s32.totalorder %s122, %s123
    %p132 = scmp.eq.s32.totalorder %s23, 0
    %p133 = por %p131, %p132
    %p134 = scmp.ne.s32.totalorder %s122, %s123
    %p135 = scmp.eq.s32.totalorder %s24, 1
    %p136 = por %p134, %p135
    %p138 = scmp.ne.s32.totalorder %s123, %s137
    %p139 = scmp.eq.s32.totalorder %s24, 0
    %p140 = por %p138, %p139
    %s142 = sadd.s32 %s141, 1
    %p145 = scmp.eq.s32.totalorder %s18, 1
    %p146 = scmp.ne.s32.totalorder %s141, %s143
    %p147 = scmp.eq.s32.totalorder %s18, 0
    %p148 = por %p146, %p147
    %p149 = scmp.ne.s32.totalorder %s141, %s143
    %p150 = scmp.eq.s32.totalorder %s23, 1
    %p151 = por %p149, %p150
    %p152 = scmp.ne.s32.totalorder %s143, %s144
    %p153 = scmp.eq.s32.totalorder %s23, 0
    %p154 = por %p152, %p153
    %p155 = scmp.ne.s32.totalorder %s143, %s144
    %p156 = scmp.eq.s32.totalorder %s24, 1
    %p157 = por %p155, %p156
    %p159 = scmp.ne.s32.totalorder %s144, %s158
    %p160 = scmp.eq.s32.totalorder %s24, 0
    %p161 = por %p159, %p160
    %s163 = sadd.s32 %s162, 1
    %p166 = scmp.eq.s32.totalorder %s18, 1
    %p167 = scmp.ne.s32.totalorder %s162, %s164
    %p168 = scmp.eq.s32.totalorder %s18, 0
    %p169 = por %p167, %p168
    %p170 = scmp.ne.s32.totalorder %s162, %s164
    %p171 = scmp.eq.s32.totalorder %s23, 1
    %p172 = por %p170, %p171
    %p173 = scmp.ne.s32.totalorder %s164, %s165
    %p174 = scmp.eq.s32.totalorder %s23, 0
    %p175 = por %p173, %p174
    %p176 = scmp.ne.s32.totalorder %s164, %s165
    %p177 = scmp.eq.s32.totalorder %s24, 1
    %p178 = por %p176, %p177
    %p180 = scmp.ne.s32.totalorder %s165, %s179
    %p181 = scmp.eq.s32.totalorder %s24, 0
    %p182 = por %p180, %p181
    %s184 = sadd.s32 %s183, 1
    %p187 = scmp.eq.s32.totalorder %s18, 1
    %p188 = scmp.ne.s32.totalorder %s183, %s185
    %p189 = scmp.eq.s32.totalorder %s18, 0
    %p190 = por %p188, %p189
    %p191 = scmp.ne.s32.totalorder %s183, %s185
    %p192 = scmp.eq.s32.totalorder %s23, 1
    %p193 = por %p191, %p192
    %p194 = scmp.ne.s32.totalorder %s185, %s186
    %p195 = scmp.eq.s32.totalorder %s23, 0
    %p196 = por %p194, %p195
    %p197 = scmp.ne.s32.totalorder %s185, %s186
    %p198 = scmp.eq.s32.totalorder %s24, 1
    %p199 = por %p197, %p198
    %p201 = scmp.ne.s32.totalorder %s186, %s200
    %p202 = scmp.eq.s32.totalorder %s24, 0
    %p203 = por %p201, %p202
    %s205 = sadd.s32 %s204, 1
    %p208 = scmp.eq.s32.totalorder %s18, 1
    %p209 = scmp.ne.s32.totalorder %s204, %s206
    %p210 = scmp.eq.s32.totalorder %s18, 0
    %p211 = por %p209, %p210
    %p212 = scmp.ne.s32.totalorder %s204, %s206
    %p213 = scmp.eq.s32.totalorder %s23, 1
    %p214 = por %p212, %p213
    %p215 = scmp.ne.s32.totalorder %s206, %s207
    %p216 = scmp.eq.s32.totalorder %s23, 0
    %p217 = por %p215, %p216
    %p218 = scmp.ne.s32.totalorder %s206, %s207
    %p219 = scmp.eq.s32.totalorder %s24, 1
    %p220 = por %p218, %p219
    %p222 = scmp.ne.s32.totalorder %s207, %s221
    %p223 = scmp.eq.s32.totalorder %s24, 0
    %p224 = por %p222, %p223
    %s226 = sadd.s32 %s225, 1
    %p229 = scmp.eq.s32.totalorder %s18, 1
    %p230 = scmp.ne.s32.totalorder %s225, %s227
    %p231 = scmp.eq.s32.totalorder %s18, 0
    %p232 = por %p230, %p231
    %p233 = scmp.ne.s32.totalorder %s225, %s227
    %p234 = scmp.eq.s32.totalorder %s23, 1
    %p235 = por %p233, %p234
    %p236 = scmp.ne.s32.totalorder %s227, %s228
    %p237 = scmp.eq.s32.totalorder %s23, 0
    %p238 = por %p236, %p237
    %p239 = scmp.ne.s32.totalorder %s227, %s228
    %p240 = scmp.eq.s32.totalorder %s24, 1
    %p241 = por %p239, %p240
    %p243 = scmp.ne.s32.totalorder %s228, %s242
    %p244 = scmp.eq.s32.totalorder %s24, 0
    %p245 = por %p243, %p244
    %s246 = ssub.s32 %s18, %s25
    %p247 = scmp.eq.s32.totalorder %s246, 0
    %s249 = sadd.s32 %s248, 1
    %s250 = scalar_select %p247, %s248, %s249
    %p253 = pneg %p247
    %p254 = scmp.eq.s32.totalorder %s18, 1
    %p255 = por %p253, %p254
    %p256 = scmp.ne.s32.totalorder %s248, %s251
    %p257 = scmp.eq.s32.totalorder %s18, 0
    %p258 = por %p256, %p257
    %p259 = scmp.ne.s32.totalorder %s248, %s251
    %p260 = scmp.eq.s32.totalorder %s23, 1
    %p261 = por %p259, %p260
    %p262 = scmp.ne.s32.totalorder %s251, %s252
    %p263 = scmp.eq.s32.totalorder %s23, 0
    %p264 = por %p262, %p263
    %p265 = scmp.ne.s32.totalorder %s251, %s252
    %p266 = scmp.eq.s32.totalorder %s24, 1
    %p267 = por %p265, %p266
    %p269 = scmp.ne.s32.totalorder %s252, %s268
    %p270 = scmp.eq.s32.totalorder %s24, 0
    %p271 = por %p269, %p270
    %s272 = ssub.s32 %s18, %s25
    %p273 = scmp.eq.s32.totalorder %s272, 0
    %s275 = sadd.s32 %s274, 1
    %s276 = scalar_select %p273, %s274, %s275
    %p279 = pneg %p273
    %p280 = scmp.eq.s32.totalorder %s18, 1
    %p281 = por %p279, %p280
    %p282 = scmp.ne.s32.totalorder %s274, %s277
    %p283 = scmp.eq.s32.totalorder %s18, 0
    %p284 = por %p282, %p283
    %p285 = scmp.ne.s32.totalorder %s274, %s277
    %p286 = scmp.eq.s32.totalorder %s23, 1
    %p287 = por %p285, %p286
    %p288 = scmp.ne.s32.totalorder %s277, %s278
    %p289 = scmp.eq.s32.totalorder %s23, 0
    %p290 = por %p288, %p289
    %p291 = scmp.ne.s32.totalorder %s277, %s278
    %p292 = scmp.eq.s32.totalorder %s24, 1
    %p293 = por %p291, %p292
    %p295 = scmp.ne.s32.totalorder %s278, %s294
    %p296 = scmp.eq.s32.totalorder %s24, 0
    %p297 = por %p295, %p296
    %p298 = scmp.le.s32.totalorder 1, %s18
    %p299 = scmp.lt.s32.totalorder %s18, 3
    %p300 = pnand %p298, %p299
    %p301 = pneg %p300
    // Predicated region
    $region9: #{vae_forward.1} parent=5 // pred_check
      _
    $region10: #{vae_forward.1} parent=5 // pred_check_branch
      %303 = sbr.rel (%p300) target = $region12
    $region11: #{vae_forward.1} parent=5 // pred_region
      %s304 = ssub.s32 %s18, 1
      // Predicated region
      $region13: #{vae_forward.1} parent=11 // pred_check
        %p305 = pneg %p91
      $region14: #{vae_forward.1} parent=11 // pred_check_branch
        %307 = sbr.rel (%p305) target = $region16
      $region15: #{vae_forward.1} parent=11 // pred_region
        _
      $region16: #{vae_forward.1} parent=11 // pred_fallthru
        _
      // Predicated region
      $region17: #{vae_forward.1} parent=11 // pred_check
        %p308 = pneg %p112
      $region18: #{vae_forward.1} parent=11 // pred_check_branch
        %310 = sbr.rel (%p308) target = $region20
      $region19: #{vae_forward.1} parent=11 // pred_region
        _
      $region20: #{vae_forward.1} parent=11 // pred_fallthru
        _
      // Predicated region
      $region21: #{vae_forward.1} parent=11 // pred_check
        %p311 = pneg %p133
      $region22: #{vae_forward.1} parent=11 // pred_check_branch
        %313 = sbr.rel (%p311) target = $region24
      $region23: #{vae_forward.1} parent=11 // pred_region
        _
      $region24: #{vae_forward.1} parent=11 // pred_fallthru
        _
      // Predicated region
      $region25: #{vae_forward.1} parent=11 // pred_check
        %p314 = pneg %p154
      $region26: #{vae_forward.1} parent=11 // pred_check_branch
        %316 = sbr.rel (%p314) target = $region28
      $region27: #{vae_forward.1} parent=11 // pred_region
        _
      $region28: #{vae_forward.1} parent=11 // pred_fallthru
        _
      // Predicated region
      $region29: #{vae_forward.1} parent=11 // pred_check
        %p317 = pneg %p175
      $region30: #{vae_forward.1} parent=11 // pred_check_branch
        %319 = sbr.rel (%p317) target = $region32
      $region31: #{vae_forward.1} parent=11 // pred_region
        _
      $region32: #{vae_forward.1} parent=11 // pred_fallthru
        _
      // Predicated region
      $region33: #{vae_forward.1} parent=11 // pred_check
        %p320 = pneg %p196
      $region34: #{vae_forward.1} parent=11 // pred_check_branch
        %322 = sbr.rel (%p320) target = $region36
      $region35: #{vae_forward.1} parent=11 // pred_region
        _
      $region36: #{vae_forward.1} parent=11 // pred_fallthru
        _
      // Predicated region
      $region37: #{vae_forward.1} parent=11 // pred_check
        %p323 = pneg %p217
      $region38: #{vae_forward.1} parent=11 // pred_check_branch
        %325 = sbr.rel (%p323) target = $region40
      $region39: #{vae_forward.1} parent=11 // pred_region
        _
      $region40: #{vae_forward.1} parent=11 // pred_fallthru
        _
      // Predicated region
      $region41: #{vae_forward.1} parent=11 // pred_check
        %p326 = pneg %p238
      $region42: #{vae_forward.1} parent=11 // pred_check_branch
        %328 = sbr.rel (%p326) target = $region44
      $region43: #{vae_forward.1} parent=11 // pred_region
        _
      $region44: #{vae_forward.1} parent=11 // pred_fallthru
        _
    $region12: #{vae_forward.1} parent=5 // pred_fallthru
      _
    %p329 = scmp.lt.s32.totalorder %s18, 2
    // Predicated region
    $region45: #{vae_forward.1} parent=5 // pred_check
      %p330 = pneg %p329
    $region46: #{vae_forward.1} parent=5 // pred_check_branch
      %332 = sbr.rel (%p330) target = $region48
    $region47: #{vae_forward.1} parent=5 // pred_region
      // Predicated region
      $region49: #{vae_forward.1} parent=47 // pred_check
        %p333 = pneg %p38
      $region50: #{vae_forward.1} parent=47 // pred_check_branch
        %335 = sbr.rel (%p333) target = $region52
      $region51: #{vae_forward.1} parent=47 // pred_region
        %s336 = smul.u32 16, %s18
        %p337 = scmp.lt.s32.totalorder %s336, 31
        %s338 = scalar_select %p337, %s336, 31
        %s339 = smul.addr %s338, 8
        %s340 = scalar_lea.vmem %s0, %s339
        %s341 = smul.u32 16, %s18
      $region52: #{vae_forward.1} parent=47 // pred_fallthru
        _
      // Predicated region
      $region53: #{vae_forward.1} parent=47 // pred_check
        %p342 = pneg %p64
      $region54: #{vae_forward.1} parent=47 // pred_check_branch
        %344 = sbr.rel (%p342) target = $region56
      $region55: #{vae_forward.1} parent=47 // pred_region
        %s345 = smul.u32 16, %s18
        %p346 = scmp.lt.s32.totalorder %s345, 31
        %s347 = scalar_select %p346, %s345, 31
        %s348 = smul.addr %s347, 8
        %s349 = scalar_lea.vmem %s1, %s348
        %s350 = smul.u32 16, %s18
      $region56: #{vae_forward.1} parent=47 // pred_fallthru
        _
    $region48: #{vae_forward.1} parent=5 // pred_fallthru
      _
    %p351 = scmp.le.s32.totalorder 1, %s18
    %p352 = scmp.lt.s32.totalorder %s18, 3
    %p353 = pnand %p351, %p352
    %p354 = pneg %p353
    // Predicated region
    $region57: #{vae_forward.1} parent=5 // pred_check
      _
    $region58: #{vae_forward.1} parent=5 // pred_check_branch
      %356 = sbr.rel (%p353) target = $region60
    $region59: #{vae_forward.1} parent=5 // pred_region
      %s357 = ssub.s32 %s18, 1
      %s358 = smul.u32 16, %s23
      %p359 = scmp.lt.s32.totalorder %s358, 31
      %s360 = scalar_select %p359, %s358, 31
      %s361 = smul.addr %s360, 8
      %s362 = scalar_lea.vmem %s0, %s361
      %p363 = pneg %p44
      %p364 = pneg %p41
      %s365 = smul.u32 16, %s23
      %p366 = scmp.lt.s32.totalorder %s365, 31
      %s367 = scalar_select %p366, %s365, 31
      %s368 = smul.addr %s367, 8
      %s369 = scalar_lea.vmem %s1, %s368
      %p370 = pneg %p70
      %p371 = pneg %p67
      %p372 = pneg %p91
      %p373 = pneg %p88
      %p374 = pneg %p112
      %p375 = pneg %p109
      %p376 = pneg %p133
      %p377 = pneg %p130
      %p378 = pneg %p154
      %p379 = pneg %p151
      %p380 = pneg %p175
      %p381 = pneg %p172
      %p382 = pneg %p196
      %p383 = pneg %p193
      %p384 = pneg %p217
      %p385 = pneg %p214
      %p386 = pneg %p238
      %p387 = pneg %p235
      %p388 = pneg %p264
      %p389 = pneg %p261
      %s390 = smul.u32 16, %s23
      %p391 = scmp.lt.s32.totalorder %s390, 31
      %s392 = scalar_select %p391, %s390, 31
      %s393 = smul.addr %s392, 8
      %s394 = scalar_lea.vmem %s10, %s393
      %p395 = pneg %p290
      %p396 = pneg %p287
      %s397 = smul.u32 16, %s23
      %p398 = scmp.lt.s32.totalorder %s397, 31
      %s399 = scalar_select %p398, %s397, 31
      %s400 = smul.addr %s399, 8
      %s401 = scalar_lea.vmem %s11, %s400
      %s402 = smul.u32 16, %s23
      %p403 = scmp.lt.s32.totalorder %s402, 31
      %s404 = scalar_select %p403, %s402, 31
      %s405 = smul.addr %s404, 8
      %s406 = scalar_lea.vmem %s0, %s405
      %s407 = smul.u32 16, %s23
      %s408 = smul.u32 16, %s23
      %p409 = scmp.lt.s32.totalorder %s408, 31
      %s410 = scalar_select %p409, %s408, 31
      %s411 = smul.addr %s410, 8
      %s412 = scalar_lea.vmem %s1, %s411
      %s413 = smul.u32 16, %s23
      %s414 = smul.u32 16, %s23
      %p415 = scmp.lt.s32.totalorder %s414, 31
      %s416 = scalar_select %p415, %s414, 31
      %s417 = smul.addr %s416, 8
      %s418 = scalar_lea.vmem %s10, %s417
      %s419 = smul.u32 16, %s23
      %s420 = smul.u32 16, %s23
      %p421 = scmp.lt.s32.totalorder %s420, 31
      %s422 = scalar_select %p421, %s420, 31
      %s423 = smul.addr %s422, 8
      %s424 = scalar_lea.vmem %s11, %s423
      %s425 = smul.u32 16, %s23
      %v426 = vld [vmem:[%s406] sm:$0xff]
      %v427 = vld [vmem:[%s406 + $0x8] sm:$0xff]
      %v428 = vld [vmem:[%s406 + $0x10] sm:$0xff]
      %v429 = vld [vmem:[%s406 + $0x18] sm:$0xff]
      %v430 = vld [vmem:[%s406 + $0x20] sm:$0xff]
      %v431 = vld [vmem:[%s406 + $0x28] sm:$0xff]
      %v432 = vld [vmem:[%s406 + $0x30] sm:$0xff]
      %v433 = vld [vmem:[%s406 + $0x38] sm:$0xff]
      %v434 = vld [vmem:[%s406 + $0x40] sm:$0xff]
      %v435 = vld [vmem:[%s406 + $0x48] sm:$0xff]
      %v436 = vld [vmem:[%s406 + $0x50] sm:$0xff]
      %v437 = vld [vmem:[%s406 + $0x58] sm:$0xff]
      %v438 = vld [vmem:[%s406 + $0x60] sm:$0xff]
      %v439 = vld [vmem:[%s406 + $0x68] sm:$0xff]
      %v440 = vld [vmem:[%s406 + $0x70] sm:$0xff]
      %v441 = vld [vmem:[%s406 + $0x78] sm:$0xff]
      %v442 = vld [vmem:[%s2] sm:$0xff]
      %v443 = vld [vmem:[%s2 + $0x8] sm:$0xff]
      %v444 = vld [vmem:[%s2 + $0x10] sm:$0xff]
      %v445 = vld [vmem:[%s2 + $0x18] sm:$0xff]
      %v446 = vld [vmem:[%s2 + $0x20] sm:$0xff]
      %v447 = vld [vmem:[%s2 + $0x28] sm:$0xff]
      %v448 = vld [vmem:[%s2 + $0x30] sm:$0xff]
      %v449 = vld [vmem:[%s2 + $0x38] sm:$0xff]
      %v450 = vld [vmem:[%s3] sm:$0x1]
      %v452 = vlaneseq
      %v453 = vshrl.u32 %v452, 7
      %v454 = vsub.s32 0, %v453
      %v455 = vrot.slane %v450, %v454
      %vm457 = vcmask 523264
      %v459 = vsel %vm457, %v426, 0
      %v462 = vsel %vm457, %v427, 0
      %v465 = vsel %vm457, %v428, 0
      %v468 = vsel %vm457, %v429, 0
      %v471 = vsel %vm457, %v430, 0
      %v474 = vsel %vm457, %v431, 0
      %v477 = vsel %vm457, %v432, 0
      %v480 = vsel %vm457, %v433, 0
      %v483 = vsel %vm457, %v434, 0
      %v486 = vsel %vm457, %v435, 0
      %v489 = vsel %vm457, %v436, 0
      %v492 = vsel %vm457, %v437, 0
      %v495 = vsel %vm457, %v438, 0
      %v498 = vsel %vm457, %v439, 0
      %v501 = vsel %vm457, %v440, 0
      %v504 = vsel %vm457, %v441, 0
      %506 = vmatprep.subr.mxu0 0.0
      %507 = vmatpush1.msra.mxu0 %v442
      %508 = vmatprep.subr.mxu0 0.0
      %509 = vmatpush1.msra.mxu0 %v443
      %510 = vmatprep.subr.mxu0 0.0
      %511 = vmatpush1.msra.mxu0 %v444
      %512 = vmatprep.subr.mxu0 0.0
      %513 = vmatpush1.msra.mxu0 %v445
      %514 = vmatprep.subr.mxu0 0.0
      %515 = vmatpush1.msra.mxu0 %v446
      %516 = vmatprep.subr.mxu0 0.0
      %517 = vmatpush1.msra.mxu0 %v447
      %518 = vmatprep.subr.mxu0 0.0
      %519 = vmatpush1.msra.mxu0 %v448
      %520 = vmatprep.subr.mxu0 0.0
      %521 = vmatpush1.msra.mxu0 %v449
      %522 = vmatprep.subr.mxu0 0.0
      %523 = vmatpush1.msra.mxu0 0.0
      %524 = vmatprep.subr.mxu0 0.0
      %525 = vmatpush1.msra.mxu0 0.0
      %526 = vmatprep.subr.mxu0 0.0
      %527 = vmatpush1.msra.mxu0 0.0
      %528 = vmatprep.subr.mxu0 0.0
      %529 = vmatpush1.msra.mxu0 0.0
      %530 = vmatprep.subr.mxu0 0.0
      %531 = vmatpush1.msra.mxu0 0.0
      %532 = vmatprep.subr.mxu0 0.0
      %533 = vmatpush1.msra.mxu0 0.0
      %534 = vmatprep.subr.mxu0 0.0
      %535 = vmatpush1.msra.mxu0 0.0
      %536 = vmatprep.subr.mxu0 0.0
      %537 = vmatpush1.msra.mxu0 0.0
      %538 = vmatprep.subr.mxu0 0.0
      %539 = vmatpush1.msra.mxu0 0.0
      %540 = vmatprep.subr.mxu0 0.0
      %541 = vmatpush1.msra.mxu0 0.0
      %542 = vmatprep.subr.mxu0 0.0
      %543 = vmatpush1.msra.mxu0 0.0
      %544 = vmatprep.subr.mxu0 0.0
      %545 = vmatpush1.msra.mxu0 0.0
      %546 = vmatprep.subr.mxu0 0.0
      %547 = vmatpush1.msra.mxu0 0.0
      %548 = vmatprep.subr.mxu0 0.0
      %549 = vmatpush1.msra.mxu0 0.0
      %550 = vmatprep.subr.mxu0 0.0
      %551 = vmatpush1.msra.mxu0 0.0
      %552 = vmatprep.subr.mxu0 0.0
      %553 = vmatpush1.msra.mxu0 0.0
      %554 = vmatprep.subr.mxu0 0.0
      %555 = vmatpush1.msra.mxu0 0.0
      %556 = vmatprep.subr.mxu0 0.0
      %557 = vmatpush1.msra.mxu0 0.0
      %558 = vmatprep.subr.mxu0 0.0
      %559 = vmatpush1.msra.mxu0 0.0
      %560 = vmatprep.subr.mxu0 0.0
      %561 = vmatpush1.msra.mxu0 0.0
      %562 = vmatprep.subr.mxu0 0.0
      %563 = vmatpush1.msra.mxu0 0.0
      %564 = vmatprep.subr.mxu0 0.0
      %565 = vmatpush1.msra.mxu0 0.0
      %566 = vmatprep.subr.mxu0 0.0
      %567 = vmatpush1.msra.mxu0 0.0
      %568 = vmatprep.subr.mxu0 0.0
      %569 = vmatpush1.msra.mxu0 0.0
      %570 = vmatprep.mubr.f32.mxu0 0.0
      %571 = vmatmul.mubr.f32.gmra.mrb[0].mxu0 %v459
      %v572 = vpop.f32.mrb[0].mxu0
      %v573 = vadd.f32 %v455, %v572
      %v574 = vpop.f32.mrb[0].mxu0
      %575 = vmatprep.mubr.f32.mxu0 0.0
      %576 = vmatmul.mubr.f32.gmra.mrb[0].mxu0 %v462
      %v577 = vpop.f32.mrb[0].mxu0
      %v578 = vadd.f32 %v455, %v577
      %v579 = vpop.f32.mrb[0].mxu0
      %580 = vmatprep.mubr.f32.mxu0 0.0
      %581 = vmatmul.mubr.f32.gmra.mrb[0].mxu0 %v465
      %v582 = vpop.f32.mrb[0].mxu0
      %v583 = vadd.f32 %v455, %v582
      %v584 = vpop.f32.mrb[0].mxu0
      %585 = vmatprep.mubr.f32.mxu0 0.0
      %586 = vmatmul.mubr.f32.gmra.mrb[0].mxu0 %v468
      %v587 = vpop.f32.mrb[0].mxu0
      %v588 = vadd.f32 %v455, %v587
      %v589 = vpop.f32.mrb[0].mxu0
      %590 = vmatprep.mubr.f32.mxu0 0.0
      %591 = vmatmul.mubr.f32.gmra.mrb[0].mxu0 %v471
      %v592 = vpop.f32.mrb[0].mxu0
      %v593 = vadd.f32 %v455, %v592
      %v594 = vpop.f32.mrb[0].mxu0
      %595 = vmatprep.mubr.f32.mxu0 0.0
      %596 = vmatmul.mubr.f32.gmra.mrb[0].mxu0 %v474
      %v597 = vpop.f32.mrb[0].mxu0
      %v598 = vadd.f32 %v455, %v597
      %v599 = vpop.f32.mrb[0].mxu0
      %600 = vmatprep.mubr.f32.mxu0 0.0
      %601 = vmatmul.mubr.f32.gmra.mrb[0].mxu0 %v477
      %v602 = vpop.f32.mrb[0].mxu0
      %v603 = vadd.f32 %v455, %v602
      %v604 = vpop.f32.mrb[0].mxu0
      %605 = vmatprep.mubr.f32.mxu0 0.0
      %606 = vmatmul.mubr.f32.gmra.mrb[0].mxu0 %v480
      %v607 = vpop.f32.mrb[0].mxu0
      %v608 = vadd.f32 %v455, %v607
      %v609 = vpop.f32.mrb[0].mxu0
      %610 = vmatprep.mubr.f32.mxu0 0.0
      %611 = vmatmul.mubr.f32.gmra.mrb[0].mxu0 %v483
      %v612 = vpop.f32.mrb[0].mxu0
      %v613 = vadd.f32 %v455, %v612
      %v614 = vpop.f32.mrb[0].mxu0
      %615 = vmatprep.mubr.f32.mxu0 0.0
      %616 = vmatmul.mubr.f32.gmra.mrb[0].mxu0 %v486
      %v617 = vpop.f32.mrb[0].mxu0
      %v618 = vadd.f32 %v455, %v617
      %v619 = vpop.f32.mrb[0].mxu0
      %620 = vmatprep.mubr.f32.mxu0 0.0
      %621 = vmatmul.mubr.f32.gmra.mrb[0].mxu0 %v489
      %v622 = vpop.f32.mrb[0].mxu0
      %v623 = vadd.f32 %v455, %v622
      %v624 = vpop.f32.mrb[0].mxu0
      %625 = vmatprep.mubr.f32.mxu0 0.0
      %626 = vmatmul.mubr.f32.gmra.mrb[0].mxu0 %v492
      %v627 = vpop.f32.mrb[0].mxu0
      %v628 = vadd.f32 %v455, %v627
      %v629 = vpop.f32.mrb[0].mxu0
      %630 = vmatprep.mubr.f32.mxu0 0.0
      %631 = vmatmul.mubr.f32.gmra.mrb[0].mxu0 %v495
      %v632 = vpop.f32.mrb[0].mxu0
      %v633 = vadd.f32 %v455, %v632
      %v634 = vpop.f32.mrb[0].mxu0
      %635 = vmatprep.mubr.f32.mxu0 0.0
      %636 = vmatmul.mubr.f32.gmra.mrb[0].mxu0 %v498
      %v637 = vpop.f32.mrb[0].mxu0
      %v638 = vadd.f32 %v455, %v637
      %v639 = vpop.f32.mrb[0].mxu0
      %640 = vmatprep.mubr.f32.mxu0 0.0
      %641 = vmatmul.mubr.f32.gmra.mrb[0].mxu0 %v501
      %v642 = vpop.f32.mrb[0].mxu0
      %v643 = vadd.f32 %v455, %v642
      %v644 = vpop.f32.mrb[0].mxu0
      %645 = vmatprep.mubr.f32.mxu0 0.0
      %646 = vmatmul.mubr.f32.gmra.mrb[0].mxu0 %v504
      %v647 = vpop.f32.mrb[0].mxu0
      %v648 = vadd.f32 %v455, %v647
      %v649 = vpop.f32.mrb[0].mxu0
      %650 = vdwg.mxu0
      %v651 = vmax.f32 %v573, 0.0
      %v652 = vmax.f32 %v578, 0.0
      %v653 = vmax.f32 %v583, 0.0
      %v654 = vmax.f32 %v588, 0.0
      %v655 = vmax.f32 %v593, 0.0
      %v656 = vmax.f32 %v598, 0.0
      %v657 = vmax.f32 %v603, 0.0
      %v658 = vmax.f32 %v608, 0.0
      %v659 = vmax.f32 %v613, 0.0
      %v660 = vmax.f32 %v618, 0.0
      %v661 = vmax.f32 %v623, 0.0
      %v662 = vmax.f32 %v628, 0.0
      %v663 = vmax.f32 %v633, 0.0
      %v664 = vmax.f32 %v638, 0.0
      %v665 = vmax.f32 %v643, 0.0
      %v666 = vmax.f32 %v648, 0.0
      %v667 = vld [vmem:[%s4] sm:$0xff]
      %v668 = vld [vmem:[%s4 + $0x8] sm:$0xff]
      %v669 = vld [vmem:[%s4 + $0x10] sm:$0xff]
      %v670 = vld [vmem:[%s4 + $0x18] sm:$0xff]
      %v671 = vld [vmem:[%s5] sm:$0x1]
      %v673 = vlaneseq
      %v674 = vshrl.u32 %v673, 7
      %v675 = vsub.s32 0, %v674
      %v676 = vrot.slane %v671, %v675
      %vm678 = vcmask 261120
      %v680 = vsel %vm678, %v651, 0
      %v683 = vsel %vm678, %v652, 0
      %v686 = vsel %vm678, %v653, 0
      %v689 = vsel %vm678, %v654, 0
      %v692 = vsel %vm678, %v655, 0
      %v695 = vsel %vm678, %v656, 0
      %v698 = vsel %vm678, %v657, 0
      %v701 = vsel %vm678, %v658, 0
      %v704 = vsel %vm678, %v659, 0
      %v707 = vsel %vm678, %v660, 0
      %v710 = vsel %vm678, %v661, 0
      %v713 = vsel %vm678, %v662, 0
      %v716 = vsel %vm678, %v663, 0
      %v719 = vsel %vm678, %v664, 0
      %v722 = vsel %vm678, %v665, 0
      %v725 = vsel %vm678, %v666, 0
      %727 = vmatprep.subr.mxu0 0.0
      %728 = vmatpush1.msra.mxu0 %v667
      %729 = vmatprep.subr.mxu0 0.0
      %730 = vmatpush1.msra.mxu0 %v668
      %731 = vmatprep.subr.mxu0 0.0
      %732 = vmatpush1.msra.mxu0 %v669
      %733 = vmatprep.subr.mxu0 0.0
      %734 = vmatpush1.msra.mxu0 %v670
      %735 = vmatprep.subr.mxu0 0.0
      %736 = vmatpush1.msra.mxu0 0.0
      %737 = vmatprep.subr.mxu0 0.0
      %738 = vmatpush1.msra.mxu0 0.0
      %739 = vmatprep.subr.mxu0 0.0
      %740 = vmatpush1.msra.mxu0 0.0
      %741 = vmatprep.subr.mxu0 0.0
      %742 = vmatpush1.msra.mxu0 0.0
      %743 = vmatprep.subr.mxu0 0.0
      %744 = vmatpush1.msra.mxu0 0.0
      %745 = vmatprep.subr.mxu0 0.0
      %746 = vmatpush1.msra.mxu0 0.0
      %747 = vmatprep.subr.mxu0 0.0
      %748 = vmatpush1.msra.mxu0 0.0
      %749 = vmatprep.subr.mxu0 0.0
      %750 = vmatpush1.msra.mxu0 0.0
      %751 = vmatprep.subr.mxu0 0.0
      %752 = vmatpush1.msra.mxu0 0.0
      %753 = vmatprep.subr.mxu0 0.0
      %754 = vmatpush1.msra.mxu0 0.0
      %755 = vmatprep.subr.mxu0 0.0
      %756 = vmatpush1.msra.mxu0 0.0
      %757 = vmatprep.subr.mxu0 0.0
      %758 = vmatpush1.msra.mxu0 0.0
      %759 = vmatprep.subr.mxu0 0.0
      %760 = vmatpush1.msra.mxu0 0.0
      %761 = vmatprep.subr.mxu0 0.0
      %762 = vmatpush1.msra.mxu0 0.0
      %763 = vmatprep.subr.mxu0 0.0
      %764 = vmatpush1.msra.mxu0 0.0
      %765 = vmatprep.subr.mxu0 0.0
      %766 = vmatpush1.msra.mxu0 0.0
      %767 = vmatprep.subr.mxu0 0.0
      %768 = vmatpush1.msra.mxu0 0.0
      %769 = vmatprep.subr.mxu0 0.0
      %770 = vmatpush1.msra.mxu0 0.0
      %771 = vmatprep.subr.mxu0 0.0
      %772 = vmatpush1.msra.mxu0 0.0
      %773 = vmatprep.subr.mxu0 0.0
      %774 = vmatpush1.msra.mxu0 0.0
      %775 = vmatprep.subr.mxu0 0.0
      %776 = vmatpush1.msra.mxu0 0.0
      %777 = vmatprep.subr.mxu0 0.0
      %778 = vmatpush1.msra.mxu0 0.0
      %779 = vmatprep.subr.mxu0 0.0
      %780 = vmatpush1.msra.mxu0 0.0
      %781 = vmatprep.subr.mxu0 0.0
      %782 = vmatpush1.msra.mxu0 0.0
      %783 = vmatprep.subr.mxu0 0.0
      %784 = vmatpush1.msra.mxu0 0.0
      %785 = vmatprep.subr.mxu0 0.0
      %786 = vmatpush1.msra.mxu0 0.0
      %787 = vmatprep.subr.mxu0 0.0
      %788 = vmatpush1.msra.mxu0 0.0
      %789 = vmatprep.subr.mxu0 0.0
      %790 = vmatpush1.msra.mxu0 0.0
      %791 = vmatprep.mubr.f32.mxu0 0.0
      %792 = vmatmul.mubr.f32.gmra.mrb[0].mxu0 %v680
      %v793 = vpop.f32.mrb[0].mxu0
      %v794 = vadd.f32 %v676, %v793
      %v795 = vpop.f32.mrb[0].mxu0
      %796 = vmatprep.mubr.f32.mxu0 0.0
      %797 = vmatmul.mubr.f32.gmra.mrb[0].mxu0 %v683
      %v798 = vpop.f32.mrb[0].mxu0
      %v799 = vadd.f32 %v676, %v798
      %v800 = vpop.f32.mrb[0].mxu0
      %801 = vmatprep.mubr.f32.mxu0 0.0
      %802 = vmatmul.mubr.f32.gmra.mrb[0].mxu0 %v686
      %v803 = vpop.f32.mrb[0].mxu0
      %v804 = vadd.f32 %v676, %v803
      %v805 = vpop.f32.mrb[0].mxu0
      %806 = vmatprep.mubr.f32.mxu0 0.0
      %807 = vmatmul.mubr.f32.gmra.mrb[0].mxu0 %v689
      %v808 = vpop.f32.mrb[0].mxu0
      %v809 = vadd.f32 %v676, %v808
      %v810 = vpop.f32.mrb[0].mxu0
      %811 = vmatprep.mubr.f32.mxu0 0.0
      %812 = vmatmul.mubr.f32.gmra.mrb[0].mxu0 %v692
      %v813 = vpop.f32.mrb[0].mxu0
      %v814 = vadd.f32 %v676, %v813
      %v815 = vpop.f32.mrb[0].mxu0
      %816 = vmatprep.mubr.f32.mxu0 0.0
      %817 = vmatmul.mubr.f32.gmra.mrb[0].mxu0 %v695
      %v818 = vpop.f32.mrb[0].mxu0
      %v819 = vadd.f32 %v676, %v818
      %v820 = vpop.f32.mrb[0].mxu0
      %821 = vmatprep.mubr.f32.mxu0 0.0
      %822 = vmatmul.mubr.f32.gmra.mrb[0].mxu0 %v698
      %v823 = vpop.f32.mrb[0].mxu0
      %v824 = vadd.f32 %v676, %v823
      %v825 = vpop.f32.mrb[0].mxu0
      %826 = vmatprep.mubr.f32.mxu0 0.0
      %827 = vmatmul.mubr.f32.gmra.mrb[0].mxu0 %v701
      %v828 = vpop.f32.mrb[0].mxu0
      %v829 = vadd.f32 %v676, %v828
      %v830 = vpop.f32.mrb[0].mxu0
      %831 = vmatprep.mubr.f32.mxu0 0.0
      %832 = vmatmul.mubr.f32.gmra.mrb[0].mxu0 %v704
      %v833 = vpop.f32.mrb[0].mxu0
      %v834 = vadd.f32 %v676, %v833
      %v835 = vpop.f32.mrb[0].mxu0
      %836 = vmatprep.mubr.f32.mxu0 0.0
      %837 = vmatmul.mubr.f32.gmra.mrb[0].mxu0 %v707
      %v838 = vpop.f32.mrb[0].mxu0
      %v839 = vadd.f32 %v676, %v838
      %v840 = vpop.f32.mrb[0].mxu0
      %841 = vmatprep.mubr.f32.mxu0 0.0
      %842 = vmatmul.mubr.f32.gmra.mrb[0].mxu0 %v710
      %v843 = vpop.f32.mrb[0].mxu0
      %v844 = vadd.f32 %v676, %v843
      %v845 = vpop.f32.mrb[0].mxu0
      %846 = vmatprep.mubr.f32.mxu0 0.0
      %847 = vmatmul.mubr.f32.gmra.mrb[0].mxu0 %v713
      %v848 = vpop.f32.mrb[0].mxu0
      %v849 = vadd.f32 %v676, %v848
      %v850 = vpop.f32.mrb[0].mxu0
      %851 = vmatprep.mubr.f32.mxu0 0.0
      %852 = vmatmul.mubr.f32.gmra.mrb[0].mxu0 %v716
      %v853 = vpop.f32.mrb[0].mxu0
      %v854 = vadd.f32 %v676, %v853
      %v855 = vpop.f32.mrb[0].mxu0
      %856 = vmatprep.mubr.f32.mxu0 0.0
      %857 = vmatmul.mubr.f32.gmra.mrb[0].mxu0 %v719
      %v858 = vpop.f32.mrb[0].mxu0
      %v859 = vadd.f32 %v676, %v858
      %v860 = vpop.f32.mrb[0].mxu0
      %861 = vmatprep.mubr.f32.mxu0 0.0
      %862 = vmatmul.mubr.f32.gmra.mrb[0].mxu0 %v722
      %v863 = vpop.f32.mrb[0].mxu0
      %v864 = vadd.f32 %v676, %v863
      %v865 = vpop.f32.mrb[0].mxu0
      %866 = vmatprep.mubr.f32.mxu0 0.0
      %867 = vmatmul.mubr.f32.gmra.mrb[0].mxu0 %v725
      %v868 = vpop.f32.mrb[0].mxu0
      %v869 = vadd.f32 %v676, %v868
      %v870 = vpop.f32.mrb[0].mxu0
      %871 = vdwg.mxu0
      %v872 = vld [vmem:[%s412] sm:$0xff]
      %v873 = vld [vmem:[%s412 + $0x8] sm:$0xff]
      %v874 = vld [vmem:[%s412 + $0x10] sm:$0xff]
      %v875 = vld [vmem:[%s412 + $0x18] sm:$0xff]
      %v876 = vld [vmem:[%s412 + $0x20] sm:$0xff]
      %v877 = vld [vmem:[%s412 + $0x28] sm:$0xff]
      %v878 = vld [vmem:[%s412 + $0x30] sm:$0xff]
      %v879 = vld [vmem:[%s412 + $0x38] sm:$0xff]
      %v880 = vld [vmem:[%s412 + $0x40] sm:$0xff]
      %v881 = vld [vmem:[%s412 + $0x48] sm:$0xff]
      %v882 = vld [vmem:[%s412 + $0x50] sm:$0xff]
      %v883 = vld [vmem:[%s412 + $0x58] sm:$0xff]
      %v884 = vld [vmem:[%s412 + $0x60] sm:$0xff]
      %v885 = vld [vmem:[%s412 + $0x68] sm:$0xff]
      %v886 = vld [vmem:[%s412 + $0x70] sm:$0xff]
      %v887 = vld [vmem:[%s412 + $0x78] sm:$0xff]
      %904 = vrot.lane.b32.xlu0 %v872, 16
      %v905 = vpop.permute.xlu0 %904
      %906 = vrot.lane.b32.xlu0 %v873, 16
      %v907 = vpop.permute.xlu0 %906
      %908 = vrot.lane.b32.xlu0 %v874, 16
      %v909 = vpop.permute.xlu0 %908
      %910 = vrot.lane.b32.xlu0 %v875, 16
      %v911 = vpop.permute.xlu0 %910
      %912 = vrot.lane.b32.xlu0 %v876, 16
      %v913 = vpop.permute.xlu0 %912
      %914 = vrot.lane.b32.xlu0 %v877, 16
      %v915 = vpop.permute.xlu0 %914
      %916 = vrot.lane.b32.xlu0 %v878, 16
      %v917 = vpop.permute.xlu0 %916
      %918 = vrot.lane.b32.xlu0 %v879, 16
      %v919 = vpop.permute.xlu0 %918
      %920 = vrot.lane.b32.xlu0 %v880, 16
      %v921 = vpop.permute.xlu0 %920
      %922 = vrot.lane.b32.xlu0 %v881, 16
      %v923 = vpop.permute.xlu0 %922
      %924 = vrot.lane.b32.xlu0 %v882, 16
      %v925 = vpop.permute.xlu0 %924
      %926 = vrot.lane.b32.xlu0 %v883, 16
      %v927 = vpop.permute.xlu0 %926
      %928 = vrot.lane.b32.xlu0 %v884, 16
      %v929 = vpop.permute.xlu0 %928
      %930 = vrot.lane.b32.xlu0 %v885, 16
      %v931 = vpop.permute.xlu0 %930
      %932 = vrot.lane.b32.xlu0 %v886, 16
      %v933 = vpop.permute.xlu0 %932
      %934 = vrot.lane.b32.xlu0 %v887, 16
      %v935 = vpop.permute.xlu0 %934
      %v952 = vmul.f32 %v794, %v905
      %v953 = vmul.f32 %v799, %v907
      %v954 = vmul.f32 %v804, %v909
      %v955 = vmul.f32 %v809, %v911
      %v956 = vmul.f32 %v814, %v913
      %v957 = vmul.f32 %v819, %v915
      %v958 = vmul.f32 %v824, %v917
      %v959 = vmul.f32 %v829, %v919
      %v960 = vmul.f32 %v834, %v921
      %v961 = vmul.f32 %v839, %v923
      %v962 = vmul.f32 %v844, %v925
      %v963 = vmul.f32 %v849, %v927
      %v964 = vmul.f32 %v854, %v929
      %v965 = vmul.f32 %v859, %v931
      %v966 = vmul.f32 %v864, %v933
      %v967 = vmul.f32 %v869, %v935
      %984 = vrot.lane.b32.xlu0 %v952, 112
      %v985 = vpop.permute.xlu0 %984
      %986 = vrot.lane.b32.xlu0 %v953, 112
      %v987 = vpop.permute.xlu0 %986
      %988 = vrot.lane.b32.xlu0 %v954, 112
      %v989 = vpop.permute.xlu0 %988
      %990 = vrot.lane.b32.xlu0 %v955, 112
      %v991 = vpop.permute.xlu0 %990
      %992 = vrot.lane.b32.xlu0 %v956, 112
      %v993 = vpop.permute.xlu0 %992
      %994 = vrot.lane.b32.xlu0 %v957, 112
      %v995 = vpop.permute.xlu0 %994
      %996 = vrot.lane.b32.xlu0 %v958, 112
      %v997 = vpop.permute.xlu0 %996
      %998 = vrot.lane.b32.xlu0 %v959, 112
      %v999 = vpop.permute.xlu0 %998
      %1000 = vrot.lane.b32.xlu0 %v960, 112
      %v1001 = vpop.permute.xlu0 %1000
      %1002 = vrot.lane.b32.xlu0 %v961, 112
      %v1003 = vpop.permute.xlu0 %1002
      %1004 = vrot.lane.b32.xlu0 %v962, 112
      %v1005 = vpop.permute.xlu0 %1004
      %1006 = vrot.lane.b32.xlu0 %v963, 112
      %v1007 = vpop.permute.xlu0 %1006
      %1008 = vrot.lane.b32.xlu0 %v964, 112
      %v1009 = vpop.permute.xlu0 %1008
      %1010 = vrot.lane.b32.xlu0 %v965, 112
      %v1011 = vpop.permute.xlu0 %1010
      %1012 = vrot.lane.b32.xlu0 %v966, 112
      %v1013 = vpop.permute.xlu0 %1012
      %1014 = vrot.lane.b32.xlu0 %v967, 112
      %v1015 = vpop.permute.xlu0 %1014
      %v1032 = vadd.f32 %v794, %v985
      %v1033 = vadd.f32 %v799, %v987
      %v1034 = vadd.f32 %v804, %v989
      %v1035 = vadd.f32 %v809, %v991
      %v1036 = vadd.f32 %v814, %v993
      %v1037 = vadd.f32 %v819, %v995
      %v1038 = vadd.f32 %v824, %v997
      %v1039 = vadd.f32 %v829, %v999
      %v1040 = vadd.f32 %v834, %v1001
      %v1041 = vadd.f32 %v839, %v1003
      %v1042 = vadd.f32 %v844, %v1005
      %v1043 = vadd.f32 %v849, %v1007
      %v1044 = vadd.f32 %v854, %v1009
      %v1045 = vadd.f32 %v859, %v1011
      %v1046 = vadd.f32 %v864, %v1013
      %v1047 = vadd.f32 %v869, %v1015
      %v1048 = vld [vmem:[%s6] sm:$0xff]
      %v1049 = vld [vmem:[%s6 + $0x8] sm:$0xff]
      %v1050 = vld [vmem:[%s7] sm:$0x1]
      %v1052 = vlaneseq
      %v1053 = vshrl.u32 %v1052, 7
      %v1054 = vsub.s32 0, %v1053
      %v1055 = vrot.slane %v1050, %v1054
      %vm1057 = vcmask 130048
      %v1059 = vsel %vm1057, %v1032, 0
      %v1062 = vsel %vm1057, %v1033, 0
      %v1065 = vsel %vm1057, %v1034, 0
      %v1068 = vsel %vm1057, %v1035, 0
      %v1071 = vsel %vm1057, %v1036, 0
      %v1074 = vsel %vm1057, %v1037, 0
      %v1077 = vsel %vm1057, %v1038, 0
      %v1080 = vsel %vm1057, %v1039, 0
      %v1083 = vsel %vm1057, %v1040, 0
      %v1086 = vsel %vm1057, %v1041, 0
      %v1089 = vsel %vm1057, %v1042, 0
      %v1092 = vsel %vm1057, %v1043, 0
      %v1095 = vsel %vm1057, %v1044, 0
      %v1098 = vsel %vm1057, %v1045, 0
      %v1101 = vsel %vm1057, %v1046, 0
      %v1104 = vsel %vm1057, %v1047, 0
      %1106 = vmatprep.subr.mxu0 0.0
      %1107 = vmatpush1.msra.mxu0 %v1048
      %1108 = vmatprep.subr.mxu0 0.0
      %1109 = vmatpush1.msra.mxu0 %v1049
      %1110 = vmatprep.subr.mxu0 0.0
      %1111 = vmatpush1.msra.mxu0 0.0
      %1112 = vmatprep.subr.mxu0 0.0
      %1113 = vmatpush1.msra.mxu0 0.0
      %1114 = vmatprep.subr.mxu0 0.0
      %1115 = vmatpush1.msra.mxu0 0.0
      %1116 = vmatprep.subr.mxu0 0.0
      %1117 = vmatpush1.msra.mxu0 0.0
      %1118 = vmatprep.subr.mxu0 0.0
      %1119 = vmatpush1.msra.mxu0 0.0
      %1120 = vmatprep.subr.mxu0 0.0
      %1121 = vmatpush1.msra.mxu0 0.0
      %1122 = vmatprep.subr.mxu0 0.0
      %1123 = vmatpush1.msra.mxu0 0.0
      %1124 = vmatprep.subr.mxu0 0.0
      %1125 = vmatpush1.msra.mxu0 0.0
      %1126 = vmatprep.subr.mxu0 0.0
      %1127 = vmatpush1.msra.mxu0 0.0
      %1128 = vmatprep.subr.mxu0 0.0
      %1129 = vmatpush1.msra.mxu0 0.0
      %1130 = vmatprep.subr.mxu0 0.0
      %1131 = vmatpush1.msra.mxu0 0.0
      %1132 = vmatprep.subr.mxu0 0.0
      %1133 = vmatpush1.msra.mxu0 0.0
      %1134 = vmatprep.subr.mxu0 0.0
      %1135 = vmatpush1.msra.mxu0 0.0
      %1136 = vmatprep.subr.mxu0 0.0
      %1137 = vmatpush1.msra.mxu0 0.0
      %1138 = vmatprep.subr.mxu0 0.0
      %1139 = vmatpush1.msra.mxu0 0.0
      %1140 = vmatprep.subr.mxu0 0.0
      %1141 = vmatpush1.msra.mxu0 0.0
      %1142 = vmatprep.subr.mxu0 0.0
      %1143 = vmatpush1.msra.mxu0 0.0
      %1144 = vmatprep.subr.mxu0 0.0
      %1145 = vmatpush1.msra.mxu0 0.0
      %1146 = vmatprep.subr.mxu0 0.0
      %1147 = vmatpush1.msra.mxu0 0.0
      %1148 = vmatprep.subr.mxu0 0.0
      %1149 = vmatpush1.msra.mxu0 0.0
      %1150 = vmatprep.subr.mxu0 0.0
      %1151 = vmatpush1.msra.mxu0 0.0
      %1152 = vmatprep.subr.mxu0 0.0
      %1153 = vmatpush1.msra.mxu0 0.0
      %1154 = vmatprep.subr.mxu0 0.0
      %1155 = vmatpush1.msra.mxu0 0.0
      %1156 = vmatprep.subr.mxu0 0.0
      %1157 = vmatpush1.msra.mxu0 0.0
      %1158 = vmatprep.subr.mxu0 0.0
      %1159 = vmatpush1.msra.mxu0 0.0
      %1160 = vmatprep.subr.mxu0 0.0
      %1161 = vmatpush1.msra.mxu0 0.0
      %1162 = vmatprep.subr.mxu0 0.0
      %1163 = vmatpush1.msra.mxu0 0.0
      %1164 = vmatprep.subr.mxu0 0.0
      %1165 = vmatpush1.msra.mxu0 0.0
      %1166 = vmatprep.subr.mxu0 0.0
      %1167 = vmatpush1.msra.mxu0 0.0
      %1168 = vmatprep.subr.mxu0 0.0
      %1169 = vmatpush1.msra.mxu0 0.0
      %1170 = vmatprep.mubr.f32.mxu0 0.0
      %1171 = vmatmul.mubr.f32.gmra.mrb[0].mxu0 %v1059
      %v1172 = vpop.f32.mrb[0].mxu0
      %v1173 = vadd.f32 %v1055, %v1172
      %v1174 = vpop.f32.mrb[0].mxu0
      %1175 = vmatprep.mubr.f32.mxu0 0.0
      %1176 = vmatmul.mubr.f32.gmra.mrb[0].mxu0 %v1062
      %v1177 = vpop.f32.mrb[0].mxu0
      %v1178 = vadd.f32 %v1055, %v1177
      %v1179 = vpop.f32.mrb[0].mxu0
      %1180 = vmatprep.mubr.f32.mxu0 0.0
      %1181 = vmatmul.mubr.f32.gmra.mrb[0].mxu0 %v1065
      %v1182 = vpop.f32.mrb[0].mxu0
      %v1183 = vadd.f32 %v1055, %v1182
      %v1184 = vpop.f32.mrb[0].mxu0
      %1185 = vmatprep.mubr.f32.mxu0 0.0
      %1186 = vmatmul.mubr.f32.gmra.mrb[0].mxu0 %v1068
      %v1187 = vpop.f32.mrb[0].mxu0
      %v1188 = vadd.f32 %v1055, %v1187
      %v1189 = vpop.f32.mrb[0].mxu0
      %1190 = vmatprep.mubr.f32.mxu0 0.0
      %1191 = vmatmul.mubr.f32.gmra.mrb[0].mxu0 %v1071
      %v1192 = vpop.f32.mrb[0].mxu0
      %v1193 = vadd.f32 %v1055, %v1192
      %v1194 = vpop.f32.mrb[0].mxu0
      %1195 = vmatprep.mubr.f32.mxu0 0.0
      %1196 = vmatmul.mubr.f32.gmra.mrb[0].mxu0 %v1074
      %v1197 = vpop.f32.mrb[0].mxu0
      %v1198 = vadd.f32 %v1055, %v1197
      %v1199 = vpop.f32.mrb[0].mxu0
      %1200 = vmatprep.mubr.f32.mxu0 0.0
      %1201 = vmatmul.mubr.f32.gmra.mrb[0].mxu0 %v1077
      %v1202 = vpop.f32.mrb[0].mxu0
      %v1203 = vadd.f32 %v1055, %v1202
      %v1204 = vpop.f32.mrb[0].mxu0
      %1205 = vmatprep.mubr.f32.mxu0 0.0
      %1206 = vmatmul.mubr.f32.gmra.mrb[0].mxu0 %v1080
      %v1207 = vpop.f32.mrb[0].mxu0
      %v1208 = vadd.f32 %v1055, %v1207
      %v1209 = vpop.f32.mrb[0].mxu0
      %1210 = vmatprep.mubr.f32.mxu0 0.0
      %1211 = vmatmul.mubr.f32.gmra.mrb[0].mxu0 %v1083
      %v1212 = vpop.f32.mrb[0].mxu0
      %v1213 = vadd.f32 %v1055, %v1212
      %v1214 = vpop.f32.mrb[0].mxu0
      %1215 = vmatprep.mubr.f32.mxu0 0.0
      %1216 = vmatmul.mubr.f32.gmra.mrb[0].mxu0 %v1086
      %v1217 = vpop.f32.mrb[0].mxu0
      %v1218 = vadd.f32 %v1055, %v1217
      %v1219 = vpop.f32.mrb[0].mxu0
      %1220 = vmatprep.mubr.f32.mxu0 0.0
      %1221 = vmatmul.mubr.f32.gmra.mrb[0].mxu0 %v1089
      %v1222 = vpop.f32.mrb[0].mxu0
      %v1223 = vadd.f32 %v1055, %v1222
      %v1224 = vpop.f32.mrb[0].mxu0
      %1225 = vmatprep.mubr.f32.mxu0 0.0
      %1226 = vmatmul.mubr.f32.gmra.mrb[0].mxu0 %v1092
      %v1227 = vpop.f32.mrb[0].mxu0
      %v1228 = vadd.f32 %v1055, %v1227
      %v1229 = vpop.f32.mrb[0].mxu0
      %1230 = vmatprep.mubr.f32.mxu0 0.0
      %1231 = vmatmul.mubr.f32.gmra.mrb[0].mxu0 %v1095
      %v1232 = vpop.f32.mrb[0].mxu0
      %v1233 = vadd.f32 %v1055, %v1232
      %v1234 = vpop.f32.mrb[0].mxu0
      %1235 = vmatprep.mubr.f32.mxu0 0.0
      %1236 = vmatmul.mubr.f32.gmra.mrb[0].mxu0 %v1098
      %v1237 = vpop.f32.mrb[0].mxu0
      %v1238 = vadd.f32 %v1055, %v1237
      %v1239 = vpop.f32.mrb[0].mxu0
      %1240 = vmatprep.mubr.f32.mxu0 0.0
      %1241 = vmatmul.mubr.f32.gmra.mrb[0].mxu0 %v1101
      %v1242 = vpop.f32.mrb[0].mxu0
      %v1243 = vadd.f32 %v1055, %v1242
      %v1244 = vpop.f32.mrb[0].mxu0
      %1245 = vmatprep.mubr.f32.mxu0 0.0
      %1246 = vmatmul.mubr.f32.gmra.mrb[0].mxu0 %v1104
      %v1247 = vpop.f32.mrb[0].mxu0
      %v1248 = vadd.f32 %v1055, %v1247
      %v1249 = vpop.f32.mrb[0].mxu0
      %1250 = vdwg.mxu0
      %v1251 = vmax.f32 %v1173, 0.0
      %v1252 = vmax.f32 %v1178, 0.0
      %v1253 = vmax.f32 %v1183, 0.0
      %v1254 = vmax.f32 %v1188, 0.0
      %v1255 = vmax.f32 %v1193, 0.0
      %v1256 = vmax.f32 %v1198, 0.0
      %v1257 = vmax.f32 %v1203, 0.0
      %v1258 = vmax.f32 %v1208, 0.0
      %v1259 = vmax.f32 %v1213, 0.0
      %v1260 = vmax.f32 %v1218, 0.0
      %v1261 = vmax.f32 %v1223, 0.0
      %v1262 = vmax.f32 %v1228, 0.0
      %v1263 = vmax.f32 %v1233, 0.0
      %v1264 = vmax.f32 %v1238, 0.0
      %v1265 = vmax.f32 %v1243, 0.0
      %v1266 = vmax.f32 %v1248, 0.0
      %v1267 = vld [vmem:[%s8] sm:$0xff]
      %v1268 = vld [vmem:[%s8 + $0x8] sm:$0xff]
      %v1269 = vld [vmem:[%s8 + $0x10] sm:$0xff]
      %v1270 = vld [vmem:[%s8 + $0x18] sm:$0xff]
      %v1271 = vld [vmem:[%s9] sm:$0x1]
      %v1273 = vlaneseq
      %v1274 = vshrl.u32 %v1273, 7
      %v1275 = vsub.s32 0, %v1274
      %v1276 = vrot.slane %v1271, %v1275
      %v1279 = vsel %vm678, %v1251, 0
      %v1282 = vsel %vm678, %v1252, 0
      %v1285 = vsel %vm678, %v1253, 0
      %v1288 = vsel %vm678, %v1254, 0
      %v1291 = vsel %vm678, %v1255, 0
      %v1294 = vsel %vm678, %v1256, 0
      %v1297 = vsel %vm678, %v1257, 0
      %v1300 = vsel %vm678, %v1258, 0
      %v1303 = vsel %vm678, %v1259, 0
      %v1306 = vsel %vm678, %v1260, 0
      %v1309 = vsel %vm678, %v1261, 0
      %v1312 = vsel %vm678, %v1262, 0
      %v1315 = vsel %vm678, %v1263, 0
      %v1318 = vsel %vm678, %v1264, 0
      %v1321 = vsel %vm678, %v1265, 0
      %v1324 = vsel %vm678, %v1266, 0
      %1326 = vmatprep.subr.mxu0 0.0
      %1327 = vmatpush1.msra.mxu0 %v1267
      %1328 = vmatprep.subr.mxu0 0.0
      %1329 = vmatpush1.msra.mxu0 %v1268
      %1330 = vmatprep.subr.mxu0 0.0
      %1331 = vmatpush1.msra.mxu0 %v1269
      %1332 = vmatprep.subr.mxu0 0.0
      %1333 = vmatpush1.msra.mxu0 %v1270
      %1334 = vmatprep.subr.mxu0 0.0
      %1335 = vmatpush1.msra.mxu0 0.0
      %1336 = vmatprep.subr.mxu0 0.0
      %1337 = vmatpush1.msra.mxu0 0.0
      %1338 = vmatprep.subr.mxu0 0.0
      %1339 = vmatpush1.msra.mxu0 0.0
      %1340 = vmatprep.subr.mxu0 0.0
      %1341 = vmatpush1.msra.mxu0 0.0
      %1342 = vmatprep.subr.mxu0 0.0
      %1343 = vmatpush1.msra.mxu0 0.0
      %1344 = vmatprep.subr.mxu0 0.0
      %1345 = vmatpush1.msra.mxu0 0.0
      %1346 = vmatprep.subr.mxu0 0.0
      %1347 = vmatpush1.msra.mxu0 0.0
      %1348 = vmatprep.subr.mxu0 0.0
      %1349 = vmatpush1.msra.mxu0 0.0
      %1350 = vmatprep.subr.mxu0 0.0
      %1351 = vmatpush1.msra.mxu0 0.0
      %1352 = vmatprep.subr.mxu0 0.0
      %1353 = vmatpush1.msra.mxu0 0.0
      %1354 = vmatprep.subr.mxu0 0.0
      %1355 = vmatpush1.msra.mxu0 0.0
      %1356 = vmatprep.subr.mxu0 0.0
      %1357 = vmatpush1.msra.mxu0 0.0
      %1358 = vmatprep.subr.mxu0 0.0
      %1359 = vmatpush1.msra.mxu0 0.0
      %1360 = vmatprep.subr.mxu0 0.0
      %1361 = vmatpush1.msra.mxu0 0.0
      %1362 = vmatprep.subr.mxu0 0.0
      %1363 = vmatpush1.msra.mxu0 0.0
      %1364 = vmatprep.subr.mxu0 0.0
      %1365 = vmatpush1.msra.mxu0 0.0
      %1366 = vmatprep.subr.mxu0 0.0
      %1367 = vmatpush1.msra.mxu0 0.0
      %1368 = vmatprep.subr.mxu0 0.0
      %1369 = vmatpush1.msra.mxu0 0.0
      %1370 = vmatprep.subr.mxu0 0.0
      %1371 = vmatpush1.msra.mxu0 0.0
      %1372 = vmatprep.subr.mxu0 0.0
      %1373 = vmatpush1.msra.mxu0 0.0
      %1374 = vmatprep.subr.mxu0 0.0
      %1375 = vmatpush1.msra.mxu0 0.0
      %1376 = vmatprep.subr.mxu0 0.0
      %1377 = vmatpush1.msra.mxu0 0.0
      %1378 = vmatprep.subr.mxu0 0.0
      %1379 = vmatpush1.msra.mxu0 0.0
      %1380 = vmatprep.subr.mxu0 0.0
      %1381 = vmatpush1.msra.mxu0 0.0
      %1382 = vmatprep.subr.mxu0 0.0
      %1383 = vmatpush1.msra.mxu0 0.0
      %1384 = vmatprep.subr.mxu0 0.0
      %1385 = vmatpush1.msra.mxu0 0.0
      %1386 = vmatprep.subr.mxu0 0.0
      %1387 = vmatpush1.msra.mxu0 0.0
      %1388 = vmatprep.subr.mxu0 0.0
      %1389 = vmatpush1.msra.mxu0 0.0
      %1390 = vmatprep.mubr.f32.mxu0 0.0
      %1391 = vmatmul.mubr.f32.gmra.mrb[0].mxu0 %v1279
      %v1392 = vpop.f32.mrb[0].mxu0
      %v1393 = vadd.f32 %v1276, %v1392
      %v1394 = vpop.f32.mrb[0].mxu0
      %1395 = vmatprep.mubr.f32.mxu0 0.0
      %1396 = vmatmul.mubr.f32.gmra.mrb[0].mxu0 %v1282
      %v1397 = vpop.f32.mrb[0].mxu0
      %v1398 = vadd.f32 %v1276, %v1397
      %v1399 = vpop.f32.mrb[0].mxu0
      %1400 = vmatprep.mubr.f32.mxu0 0.0
      %1401 = vmatmul.mubr.f32.gmra.mrb[0].mxu0 %v1285
      %v1402 = vpop.f32.mrb[0].mxu0
      %v1403 = vadd.f32 %v1276, %v1402
      %v1404 = vpop.f32.mrb[0].mxu0
      %1405 = vmatprep.mubr.f32.mxu0 0.0
      %1406 = vmatmul.mubr.f32.gmra.mrb[0].mxu0 %v1288
      %v1407 = vpop.f32.mrb[0].mxu0
      %v1408 = vadd.f32 %v1276, %v1407
      %v1409 = vpop.f32.mrb[0].mxu0
      %1410 = vmatprep.mubr.f32.mxu0 0.0
      %1411 = vmatmul.mubr.f32.gmra.mrb[0].mxu0 %v1291
      %v1412 = vpop.f32.mrb[0].mxu0
      %v1413 = vadd.f32 %v1276, %v1412
      %v1414 = vpop.f32.mrb[0].mxu0
      %1415 = vmatprep.mubr.f32.mxu0 0.0
      %1416 = vmatmul.mubr.f32.gmra.mrb[0].mxu0 %v1294
      %v1417 = vpop.f32.mrb[0].mxu0
      %v1418 = vadd.f32 %v1276, %v1417
      %v1419 = vpop.f32.mrb[0].mxu0
      %1420 = vmatprep.mubr.f32.mxu0 0.0
      %1421 = vmatmul.mubr.f32.gmra.mrb[0].mxu0 %v1297
      %v1422 = vpop.f32.mrb[0].mxu0
      %v1423 = vadd.f32 %v1276, %v1422
      %v1424 = vpop.f32.mrb[0].mxu0
      %1425 = vmatprep.mubr.f32.mxu0 0.0
      %1426 = vmatmul.mubr.f32.gmra.mrb[0].mxu0 %v1300
      %v1427 = vpop.f32.mrb[0].mxu0
      %v1428 = vadd.f32 %v1276, %v1427
      %v1429 = vpop.f32.mrb[0].mxu0
      %1430 = vmatprep.mubr.f32.mxu0 0.0
      %1431 = vmatmul.mubr.f32.gmra.mrb[0].mxu0 %v1303
      %v1432 = vpop.f32.mrb[0].mxu0
      %v1433 = vadd.f32 %v1276, %v1432
      %v1434 = vpop.f32.mrb[0].mxu0
      %1435 = vmatprep.mubr.f32.mxu0 0.0
      %1436 = vmatmul.mubr.f32.gmra.mrb[0].mxu0 %v1306
      %v1437 = vpop.f32.mrb[0].mxu0
      %v1438 = vadd.f32 %v1276, %v1437
      %v1439 = vpop.f32.mrb[0].mxu0
      %1440 = vmatprep.mubr.f32.mxu0 0.0
      %1441 = vmatmul.mubr.f32.gmra.mrb[0].mxu0 %v1309
      %v1442 = vpop.f32.mrb[0].mxu0
      %v1443 = vadd.f32 %v1276, %v1442
      %v1444 = vpop.f32.mrb[0].mxu0
      %1445 = vmatprep.mubr.f32.mxu0 0.0
      %1446 = vmatmul.mubr.f32.gmra.mrb[0].mxu0 %v1312
      %v1447 = vpop.f32.mrb[0].mxu0
      %v1448 = vadd.f32 %v1276, %v1447
      %v1449 = vpop.f32.mrb[0].mxu0
      %1450 = vmatprep.mubr.f32.mxu0 0.0
      %1451 = vmatmul.mubr.f32.gmra.mrb[0].mxu0 %v1315
      %v1452 = vpop.f32.mrb[0].mxu0
      %v1453 = vadd.f32 %v1276, %v1452
      %v1454 = vpop.f32.mrb[0].mxu0
      %1455 = vmatprep.mubr.f32.mxu0 0.0
      %1456 = vmatmul.mubr.f32.gmra.mrb[0].mxu0 %v1318
      %v1457 = vpop.f32.mrb[0].mxu0
      %v1458 = vadd.f32 %v1276, %v1457
      %v1459 = vpop.f32.mrb[0].mxu0
      %1460 = vmatprep.mubr.f32.mxu0 0.0
      %1461 = vmatmul.mubr.f32.gmra.mrb[0].mxu0 %v1321
      %v1462 = vpop.f32.mrb[0].mxu0
      %v1463 = vadd.f32 %v1276, %v1462
      %v1464 = vpop.f32.mrb[0].mxu0
      %1465 = vmatprep.mubr.f32.mxu0 0.0
      %1466 = vmatmul.mubr.f32.gmra.mrb[0].mxu0 %v1324
      %v1467 = vpop.f32.mrb[0].mxu0
      %v1468 = vadd.f32 %v1276, %v1467
      %v1469 = vpop.f32.mrb[0].mxu0
      %1470 = vdwg.mxu0
      %v1471 = vxor.u32 %v1393, 2147483648
      %v1472 = vxor.u32 %v1398, 2147483648
      %v1473 = vxor.u32 %v1403, 2147483648
      %v1474 = vxor.u32 %v1408, 2147483648
      %v1475 = vxor.u32 %v1413, 2147483648
      %v1476 = vxor.u32 %v1418, 2147483648
      %v1477 = vxor.u32 %v1423, 2147483648
      %v1478 = vxor.u32 %v1428, 2147483648
      %v1479 = vxor.u32 %v1433, 2147483648
      %v1480 = vxor.u32 %v1438, 2147483648
      %v1481 = vxor.u32 %v1443, 2147483648
      %v1482 = vxor.u32 %v1448, 2147483648
      %v1483 = vxor.u32 %v1453, 2147483648
      %v1484 = vxor.u32 %v1458, 2147483648
      %v1485 = vxor.u32 %v1463, 2147483648
      %v1486 = vxor.u32 %v1468, 2147483648
      %v1487 = vmul.f32 %v1471, 1.442695
      %v1488 = vpow.pop %v1487
      %v1489 = vmul.f32 %v1472, 1.442695
      %v1490 = vpow.pop %v1489
      %v1491 = vmul.f32 %v1473, 1.442695
      %v1492 = vpow.pop %v1491
      %v1493 = vmul.f32 %v1474, 1.442695
      %v1494 = vpow.pop %v1493
      %v1495 = vmul.f32 %v1475, 1.442695
      %v1496 = vpow.pop %v1495
      %v1497 = vmul.f32 %v1476, 1.442695
      %v1498 = vpow.pop %v1497
      %v1499 = vmul.f32 %v1477, 1.442695
      %v1500 = vpow.pop %v1499
      %v1501 = vmul.f32 %v1478, 1.442695
      %v1502 = vpow.pop %v1501
      %v1503 = vmul.f32 %v1479, 1.442695
      %v1504 = vpow.pop %v1503
      %v1505 = vmul.f32 %v1480, 1.442695
      %v1506 = vpow.pop %v1505
      %v1507 = vmul.f32 %v1481, 1.442695
      %v1508 = vpow.pop %v1507
      %v1509 = vmul.f32 %v1482, 1.442695
      %v1510 = vpow.pop %v1509
      %v1511 = vmul.f32 %v1483, 1.442695
      %v1512 = vpow.pop %v1511
      %v1513 = vmul.f32 %v1484, 1.442695
      %v1514 = vpow.pop %v1513
      %v1515 = vmul.f32 %v1485, 1.442695
      %v1516 = vpow.pop %v1515
      %v1517 = vmul.f32 %v1486, 1.442695
      %v1518 = vpow.pop %v1517
      %v1519 = vadd.f32 %v1488, 1.0
      %v1520 = vadd.f32 %v1490, 1.0
      %v1521 = vadd.f32 %v1492, 1.0
      %v1522 = vadd.f32 %v1494, 1.0
      %v1523 = vadd.f32 %v1496, 1.0
      %v1524 = vadd.f32 %v1498, 1.0
      %v1525 = vadd.f32 %v1500, 1.0
      %v1526 = vadd.f32 %v1502, 1.0
      %v1527 = vadd.f32 %v1504, 1.0
      %v1528 = vadd.f32 %v1506, 1.0
      %v1529 = vadd.f32 %v1508, 1.0
      %v1530 = vadd.f32 %v1510, 1.0
      %v1531 = vadd.f32 %v1512, 1.0
      %v1532 = vadd.f32 %v1514, 1.0
      %v1533 = vadd.f32 %v1516, 1.0
      %v1534 = vadd.f32 %v1518, 1.0
      %v1535 = vrcp.pop %v1519
      %v1536 = vmul.f32 1.0, %v1535
      %v1537 = vrcp.pop %v1520
      %v1538 = vmul.f32 1.0, %v1537
      %v1539 = vrcp.pop %v1521
      %v1540 = vmul.f32 1.0, %v1539
      %v1541 = vrcp.pop %v1522
      %v1542 = vmul.f32 1.0, %v1541
      %v1543 = vrcp.pop %v1523
      %v1544 = vmul.f32 1.0, %v1543
      %v1545 = vrcp.pop %v1524
      %v1546 = vmul.f32 1.0, %v1545
      %v1547 = vrcp.pop %v1525
      %v1548 = vmul.f32 1.0, %v1547
      %v1549 = vrcp.pop %v1526
      %v1550 = vmul.f32 1.0, %v1549
      %v1551 = vrcp.pop %v1527
      %v1552 = vmul.f32 1.0, %v1551
      %v1553 = vrcp.pop %v1528
      %v1554 = vmul.f32 1.0, %v1553
      %v1555 = vrcp.pop %v1529
      %v1556 = vmul.f32 1.0, %v1555
      %v1557 = vrcp.pop %v1530
      %v1558 = vmul.f32 1.0, %v1557
      %v1559 = vrcp.pop %v1531
      %v1560 = vmul.f32 1.0, %v1559
      %v1561 = vrcp.pop %v1532
      %v1562 = vmul.f32 1.0, %v1561
      %v1563 = vrcp.pop %v1533
      %v1564 = vmul.f32 1.0, %v1563
      %v1565 = vrcp.pop %v1534
      %v1566 = vmul.f32 1.0, %v1565
      %1567 = vst.msk [vmem:[%s418] sm:$0xff] %vm457, %v1536
      %1568 = vst.msk [vmem:[%s418 + $0x8] sm:$0xff] %vm457, %v1538
      %1569 = vst.msk [vmem:[%s418 + $0x10] sm:$0xff] %vm457, %v1540
      %1570 = vst.msk [vmem:[%s418 + $0x18] sm:$0xff] %vm457, %v1542
      %1571 = vst.msk [vmem:[%s418 + $0x20] sm:$0xff] %vm457, %v1544
      %1572 = vst.msk [vmem:[%s418 + $0x28] sm:$0xff] %vm457, %v1546
      %1573 = vst.msk [vmem:[%s418 + $0x30] sm:$0xff] %vm457, %v1548
      %1574 = vst.msk [vmem:[%s418 + $0x38] sm:$0xff] %vm457, %v1550
      %1575 = vst.msk [vmem:[%s418 + $0x40] sm:$0xff] %vm457, %v1552
      %1576 = vst.msk [vmem:[%s418 + $0x48] sm:$0xff] %vm457, %v1554
      %1577 = vst.msk [vmem:[%s418 + $0x50] sm:$0xff] %vm457, %v1556
      %1578 = vst.msk [vmem:[%s418 + $0x58] sm:$0xff] %vm457, %v1558
      %1579 = vst.msk [vmem:[%s418 + $0x60] sm:$0xff] %vm457, %v1560
      %1580 = vst.msk [vmem:[%s418 + $0x68] sm:$0xff] %vm457, %v1562
      %1581 = vst.msk [vmem:[%s418 + $0x70] sm:$0xff] %vm457, %v1564
      %1582 = vst.msk [vmem:[%s418 + $0x78] sm:$0xff] %vm457, %v1566
      %1583 = vst [vmem:[%s424] sm:$0xff] %v794
      %1584 = vst [vmem:[%s424 + $0x8] sm:$0xff] %v799
      %1585 = vst [vmem:[%s424 + $0x10] sm:$0xff] %v804
      %1586 = vst [vmem:[%s424 + $0x18] sm:$0xff] %v809
      %1587 = vst [vmem:[%s424 + $0x20] sm:$0xff] %v814
      %1588 = vst [vmem:[%s424 + $0x28] sm:$0xff] %v819
      %1589 = vst [vmem:[%s424 + $0x30] sm:$0xff] %v824
      %1590 = vst [vmem:[%s424 + $0x38] sm:$0xff] %v829
      %1591 = vst [vmem:[%s424 + $0x40] sm:$0xff] %v834
      %1592 = vst [vmem:[%s424 + $0x48] sm:$0xff] %v839
      %1593 = vst [vmem:[%s424 + $0x50] sm:$0xff] %v844
      %1594 = vst [vmem:[%s424 + $0x58] sm:$0xff] %v849
      %1595 = vst [vmem:[%s424 + $0x60] sm:$0xff] %v854
      %1596 = vst [vmem:[%s424 + $0x68] sm:$0xff] %v859
      %1597 = vst [vmem:[%s424 + $0x70] sm:$0xff] %v864
      %1598 = vst [vmem:[%s424 + $0x78] sm:$0xff] %v869
      %s1599 = smul.u32 16, %s23
      %p1600 = scmp.lt.s32.totalorder %s1599, 31
      %s1601 = scalar_select %p1600, %s1599, 31
      %s1602 = smul.addr %s1601, 8
      %s1603 = scalar_lea.vmem %s10, %s1602
      %s1604 = smul.u32 16, %s23
      %p1605 = scmp.lt.s32.totalorder %s1604, 31
      %s1606 = scalar_select %p1605, %s1604, 31
      %s1607 = smul.addr %s1606, 8
      %s1608 = scalar_lea.vmem %s11, %s1607
      // Predicated region
      $region61: #{vae_forward.1} parent=59 // pred_check
        %p1609 = pneg %p261
      $region62: #{vae_forward.1} parent=59 // pred_check_branch
        %1611 = sbr.rel (%p1609) target = $region64
      $region63: #{vae_forward.1} parent=59 // pred_region
        %s1612 = smul.u32 16, %s23
      $region64: #{vae_forward.1} parent=59 // pred_fallthru
        _
      // Predicated region
      $region65: #{vae_forward.1} parent=59 // pred_check
        %p1613 = pneg %p287
      $region66: #{vae_forward.1} parent=59 // pred_check_branch
        %1615 = sbr.rel (%p1613) target = $region68
      $region67: #{vae_forward.1} parent=59 // pred_region
        %s1616 = smul.u32 16, %s23
      $region68: #{vae_forward.1} parent=59 // pred_fallthru
        _
    $region60: #{vae_forward.1} parent=5 // pred_fallthru
      _
    %p1617 = scmp.le.s32.totalorder 2, %s18
    // Predicated region
    $region69: #{vae_forward.1} parent=5 // pred_check
      %p1618 = pneg %p1617
    $region70: #{vae_forward.1} parent=5 // pred_check_branch
      %1620 = sbr.rel (%p1618) target = $region72
    $region71: #{vae_forward.1} parent=5 // pred_region
      %s1621 = ssub.s32 %s18, 2
      // Predicated region
      $region73: #{vae_forward.1} parent=71 // pred_check
        %p1622 = pneg %p267
      $region74: #{vae_forward.1} parent=71 // pred_check_branch
        %1624 = sbr.rel (%p1622) target = $region76
      $region75: #{vae_forward.1} parent=71 // pred_region
        %s1625 = smul.u32 16, %s24
        %p1626 = scmp.lt.s32.totalorder %s1625, 31
        %s1627 = scalar_select %p1626, %s1625, 31
        %s1628 = smul.addr %s1627, 8
        %s1629 = scalar_lea.vmem %s10, %s1628
      $region76: #{vae_forward.1} parent=71 // pred_fallthru
        _
      // Predicated region
      $region77: #{vae_forward.1} parent=71 // pred_check
        %p1630 = pneg %p293
      $region78: #{vae_forward.1} parent=71 // pred_check_branch
        %1632 = sbr.rel (%p1630) target = $region80
      $region79: #{vae_forward.1} parent=71 // pred_region
        %s1633 = smul.u32 16, %s24
        %p1634 = scmp.lt.s32.totalorder %s1633, 31
        %s1635 = scalar_select %p1634, %s1633, 31
        %s1636 = smul.addr %s1635, 8
        %s1637 = scalar_lea.vmem %s11, %s1636
      $region80: #{vae_forward.1} parent=71 // pred_fallthru
        _
    $region72: #{vae_forward.1} parent=5 // pred_fallthru
      _
  $region6: #{vae_forward.1} parent=0 // loop_footer
    %s22 = sadd.s32 1, %s18
  $region7: #{vae_forward.1} parent=0 // loop_footer_branch
    %17 = sbr.rel target = $region3
  $region8: #{vae_forward.1} parent=0 // loop_exit
    _

</llo_original>
